<compile_context>
chip_gen: v7x
topology: tpu7x:2x2x1
jax: 0.10.0
libtpu: 0.0.40
codegen_flags: <defaults>
</compile_context>

<pallas_src>
import functools

import jax
import jax.numpy as jnp
from jax.experimental import pallas as pl
from jax.experimental.pallas import tpu as pltpu


# -------------------------- configuration (small, consistent w/ module) -----
INPUT_DIM = 34      # n_joints
ENC_DIM = 128       # encoder_layers=[128]
RNN_DIM = 64        # rnn_dim
N_SEEDS = 4         # n_seeds (small for the example)
N_SEQS = 10         # sequence length of x
BATCH = 2
DEC_PAD = 128       # decoder columns padded to one 128-lane tile inside W_roll


# ------------------------------------------------------------------- kernel -
def state_space_kernel(x_seed_ref, enc_w_ref, enc_b_ref, w_ih_ref, w_hh_ref,
                       b_ref, w_roll_ref, dec_b_ref, out_ref, *, n_seeds):
    """Hoisted encoder/x-gates -> seeded LSTM -> fused recurrent+decoder rollout."""
    NB, D = x_seed_ref.shape            # (n_seeds*B, D), step-major rows (i*B + b)
    B = NB // n_seeds
    n_out = out_ref.shape[1] // D
    H = w_hh_ref.shape[0]
    G = 4 * H

    def gate_update(gates, c):
        # Gate columns packed [i, f, o, g]: the three sigmoid gates are one
        # contiguous 3H-lane region, the tanh gate the last H lanes.
        # sigmoid(x) == 0.5 * tanh(0.5 * x) + 0.5  (exact; single EUP op / vreg).
        sig = 0.5 * jnp.tanh(0.5 * gates[:, :3 * H]) + 0.5
        i_g = sig[:, 0:H]
        f_g = sig[:, H:2 * H]
        o_g = sig[:, 2 * H:3 * H]
        g_g = jnp.tanh(gates[:, 3 * H:G])
        c_new = f_g * c + i_g * g_g
        h_new = o_g * jnp.tanh(c_new)
        return h_new, c_new

    b_g = b_ref[...]                                             # (1, 4H) f32

    # ---- hoisted, batched encoder + input-gate matmuls (off the recurrence) --
    xs = x_seed_ref[...].astype(jnp.bfloat16)                    # (n_seeds*B, D)
    emb = jnp.maximum(
        jnp.dot(xs, enc_w_ref[...], preferred_element_type=jnp.float32)
        + enc_b_ref[...], 0.0)                                   # (n_seeds*B, E) f32
    x_gates = jnp.dot(emb.astype(jnp.bfloat16), w_ih_ref[...],
                      preferred_element_type=jnp.float32) + b_g  # (n_seeds*B, 4H)

    h = jnp.zeros((B, H), dtype=jnp.float32)
    c = jnp.zeros((B, H), dtype=jnp.float32)

    # ---- seed recurrence: only the (B,H)x(H,4H) recurrent dot is serial ------
    for i in range(n_seeds):
        gates = x_gates[i * B:(i + 1) * B, :]                    # static sublane slice
        if i > 0:   # h == 0 on the first step -> the recurrent term is exactly 0
            gates = gates + jnp.dot(h.astype(jnp.bfloat16), w_hh_ref[...],
                                    preferred_element_type=jnp.float32)
        h, c = gate_update(gates, c)

    # ---- rollout: fixed zero LSTM input => gates come from h @ W_hh only. ----
    # One fused dot per step with W_roll = [w_hh | dec_w(pad)] yields dec(h_k)
    # for output k AND the gates producing h_{k+1}.  The last step contracts
    # only the (lane-aligned) decoder columns: the gate columns are dead there.
    dec_b = dec_b_ref[...]                                       # (1, D)
    prev = x_seed_ref[(n_seeds - 1) * B:n_seeds * B, :]          # residual anchor
    outs = []
    for k in range(n_out):
        h_b = h.astype(jnp.bfloat16)
        if k + 1 < n_out:
            fused = jnp.dot(h_b, w_roll_ref[...],
                            preferred_element_type=jnp.float32)  # (B, G+DEC_PAD)
            prev = fused[:, G:G + D] + dec_b + prev              # residual_step
            outs.append(prev)
            h, c = gate_update(fused[:, :G] + b_g, c)
        else:
            dec = jnp.dot(h_b, w_roll_ref[:, G:],                # (B, DEC_PAD)
                          preferred_element_type=jnp.float32)[:, :D]
            prev = dec + dec_b + prev
            outs.append(prev)

    # Single lane-dense writeback: (B, n_out*D); wrapper reshapes outside.
    out_ref[...] = jnp.concatenate(outs, axis=1).astype(out_ref.dtype)


# ----------------------------------------------------- offline weight packing
def pack_params(params, dec_pad=DEC_PAD):
    """One-time packing: gate reorder to [i,f,o,g], bf16 cast, fused W_roll.

    Run once at parameter-load time (NOT per forward call)."""
    H = params["w_hh"].shape[0]
    D = params["dec_w"].shape[1]

    def reorder(w):  # columns are H-wide blocks in PyTorch order [i, f, g, o]
        i_b = w[..., 0 * H:1 * H]
        f_b = w[..., 1 * H:2 * H]
        g_b = w[..., 2 * H:3 * H]
        o_b = w[..., 3 * H:4 * H]
        return jnp.concatenate([i_b, f_b, o_b, g_b], axis=-1)

    w_ih_r = reorder(params["w_ih"]).astype(jnp.bfloat16)        # (E, 4H)
    w_hh_r = reorder(params["w_hh"]).astype(jnp.bfloat16)        # (H, 4H)
    b_r = reorder(params["b"]).astype(jnp.float32)               # (1, 4H)
    dec_w_pad = jnp.zeros((H, dec_pad), jnp.bfloat16).at[:, :D].set(
        params["dec_w"].astype(jnp.bfloat16))
    w_roll = jnp.concatenate([w_hh_r, dec_w_pad], axis=1)        # (H, 4H + DEC_PAD)

    return {
        "enc_w": params["enc_w"].astype(jnp.bfloat16),
        "enc_b": params["enc_b"].astype(jnp.float32),
        "w_ih": w_ih_r,
        "w_hh": w_hh_r,
        "b": b_r,
        "w_roll": w_roll,
        "dec_b": params["dec_b"].astype(jnp.float32),
    }


# ------------------------------------------------------------------- wrapper -
def state_space_2d_joints(x, packed, n_seeds=N_SEEDS):
    """Single un-gridded pallas_call; whole problem is VMEM-resident."""
    B, T, D = x.shape
    n_out = T - n_seeds
    # Layout plumbing (wrapper side): step-major flatten of the seed frames so
    # the hoisted encoder / input-gate matmuls fill the vreg sublanes and each
    # seed step's gate rows are a contiguous static sublane slice in-kernel.
    x_seed = jnp.transpose(x[:, :n_seeds, :], (1, 0, 2)).reshape(n_seeds * B, D)

    vmem = pl.BlockSpec(memory_space=pltpu.MemorySpace.VMEM)
    kernel = functools.partial(state_space_kernel, n_seeds=n_seeds)
    out2d = pl.pallas_call(
        kernel,
        out_shape=jax.ShapeDtypeStruct((B, n_out * D), jnp.float32),
        in_specs=[vmem] * 8,
        out_specs=vmem,
    )(x_seed, packed["enc_w"], packed["enc_b"], packed["w_ih"],
      packed["w_hh"], packed["b"], packed["w_roll"], packed["dec_b"])
    return out2d.reshape(B, n_out, D)


# -------------------------- pure-JAX reference (f32, standard gate layout) ---
def _lstm_step_ref(x_in, h, c, w_ih, w_hh, b):
    gates = x_in @ w_ih + h @ w_hh + b
    H = h.shape[-1]
    i_g = jax.nn.sigmoid(gates[:, 0 * H:1 * H])
    f_g = jax.nn.sigmoid(gates[:, 1 * H:2 * H])
    g_g = jnp.tanh(gates[:, 2 * H:3 * H])
    o_g = jax.nn.sigmoid(gates[:, 3 * H:4 * H])
    c_new = f_g * c + i_g * g_g
    return o_g * jnp.tanh(c_new), c_new


def reference_forward(x, params, n_seeds=N_SEEDS):
    B, T, D = x.shape
    H = params["w_hh"].shape[0]
    h = jnp.zeros((B, H), jnp.float32)
    c = jnp.zeros((B, H), jnp.float32)
    for i in range(n_seeds):
        emb = jnp.maximum(x[:, i, :] @ params["enc_w"] + params["enc_b"], 0.0)
        h, c = _lstm_step_ref(emb, h, c, params["w_ih"], params["w_hh"], params["b"])
    outs = []
    dec = h @ params["dec_w"] + params["dec_b"]
    outs.append(dec + x[:, n_seeds - 1, :])
    zero_in = jnp.zeros((B, params["w_ih"].shape[0]), jnp.float32)
    for _ in range(T - n_seeds - 1):
        h, c = _lstm_step_ref(zero_in, h, c, params["w_ih"], params["w_hh"], params["b"])
        dec = h @ params["dec_w"] + params["dec_b"]
        outs.append(dec + outs[-1])
    return jnp.stack(outs, axis=1)


def init_params(key):
    """Deterministic synthetic parameters (PyTorch-style uniform fan-in init)."""
    ks = jax.random.split(key, 8)

    def u(k, shape, fan_in):
        bound = 1.0 / jnp.sqrt(fan_in)
        return jax.random.uniform(k, shape, jnp.float32, -bound, bound)

    enc_w = u(ks[0], (INPUT_DIM, ENC_DIM), INPUT_DIM)          # Linear(34,128).T
    enc_b = u(ks[1], (1, ENC_DIM), INPUT_DIM)
    w_ih = u(ks[2], (ENC_DIM, 4 * RNN_DIM), RNN_DIM)           # LSTMCell weight_ih.T
    w_hh = u(ks[3], (RNN_DIM, 4 * RNN_DIM), RNN_DIM)           # LSTMCell weight_hh.T
    b_ih = u(ks[4], (1, 4 * RNN_DIM), RNN_DIM)
    b_hh = u(ks[5], (1, 4 * RNN_DIM), RNN_DIM)
    dec_w = u(ks[6], (RNN_DIM, INPUT_DIM), RNN_DIM)            # Linear(64,34).T
    dec_b = u(ks[7], (1, INPUT_DIM), RNN_DIM)
    return {
        "enc_w": enc_w, "enc_b": enc_b,
        "w_ih": w_ih, "w_hh": w_hh, "b": b_ih + b_hh,
        "dec_w": dec_w, "dec_b": dec_b,
    }


if __name__ == "__main__":
    key = jax.random.PRNGKey(0)
    kx, kp = jax.random.split(key)
    x = jax.random.normal(kx, (BATCH, N_SEQS, INPUT_DIM), jnp.float32)
    params = init_params(kp)

    # Pack once at parameter-load time; per-call path only sees packed arrays.
    packed = pack_params(params)
    packed = jax.tree_util.tree_map(jax.block_until_ready, packed)

    out = state_space_2d_joints(x, packed)
    out = jax.block_until_ready(out)

    ref = reference_forward(x, params)
    assert out.shape == (BATCH, N_SEQS - N_SEEDS, INPUT_DIM), out.shape
    # Tolerance loosened vs the f32 reference: expected drift from bf16 weights /
    # bf16 MXU operands accumulated through the 10-step recurrence (not a bug).
    assert jnp.allclose(out, ref, atol=5e-2, rtol=5e-2), "mismatch vs reference"

    print("KERNEL_OK")
</pallas_src>

<mosaic_0001>
module attributes {stable_mosaic.version = 11 : i64} {
  func.func @state_space_kernel(%arg0: memref<8x34xf32, #tpu.memory_space<vmem>>, %arg1: memref<34x128xbf16, #tpu.memory_space<vmem>>, %arg2: memref<1x128xf32, #tpu.memory_space<vmem>>, %arg3: memref<128x256xbf16, #tpu.memory_space<vmem>>, %arg4: memref<64x256xbf16, #tpu.memory_space<vmem>>, %arg5: memref<1x256xf32, #tpu.memory_space<vmem>>, %arg6: memref<64x384xbf16, #tpu.memory_space<vmem>>, %arg7: memref<1x34xf32, #tpu.memory_space<vmem>>, %arg8: memref<2x204xf32, #tpu.memory_space<vmem>>) attributes {dimension_semantics = [], scalar_prefetch = 0 : i64, scratch_operands = 0 : i64, tpu.core_type = #tpu.core_type<tc>} {
    %c0 = arith.constant 0 : index
    %c0_0 = arith.constant 0 : index
    %0 = vector.load %arg5[%c0, %c0_0] : memref<1x256xf32, #tpu.memory_space<vmem>>, vector<1x256xf32>
    %c0_1 = arith.constant 0 : index
    %c0_2 = arith.constant 0 : index
    %1 = vector.load %arg0[%c0_1, %c0_2] : memref<8x34xf32, #tpu.memory_space<vmem>>, vector<8x34xf32>
    %2 = arith.truncf %1 : vector<8x34xf32> to vector<8x34xbf16>
    %c0_3 = arith.constant 0 : index
    %c0_4 = arith.constant 0 : index
    %3 = vector.load %arg1[%c0_3, %c0_4] : memref<34x128xbf16, #tpu.memory_space<vmem>>, vector<34x128xbf16>
    %cst = arith.constant dense<0.000000e+00> : vector<8x128xf32>
    %4 = tpu.matmul %2, %3, %cst {dimension_numbers = #tpu.dot_dimension_numbers<[1], [0], [0], [1], [0, 0, 1, 1], [], []>} : vector<8x34xbf16>, vector<34x128xbf16>, vector<8x128xf32> -> vector<8x128xf32>
    %c0_5 = arith.constant 0 : index
    %c0_6 = arith.constant 0 : index
    %5 = vector.load %arg2[%c0_5, %c0_6] : memref<1x128xf32, #tpu.memory_space<vmem>>, vector<1x128xf32>
    %6 = vector.broadcast %5 : vector<1x128xf32> to vector<8x128xf32>
    %7 = arith.addf %4, %6 : vector<8x128xf32>
    %cst_7 = arith.constant 0.000000e+00 : f32
    %8 = vector.broadcast %cst_7 : f32 to vector<8x128xf32>
    %9 = arith.maximumf %7, %8 : vector<8x128xf32>
    %10 = arith.truncf %9 : vector<8x128xf32> to vector<8x128xbf16>
    %c0_8 = arith.constant 0 : index
    %c0_9 = arith.constant 0 : index
    %11 = vector.load %arg3[%c0_8, %c0_9] : memref<128x256xbf16, #tpu.memory_space<vmem>>, vector<128x256xbf16>
    %cst_10 = arith.constant dense<0.000000e+00> : vector<8x256xf32>
    %12 = tpu.matmul %10, %11, %cst_10 {dimension_numbers = #tpu.dot_dimension_numbers<[1], [0], [0], [1], [0, 0, 1, 1], [], []>} : vector<8x128xbf16>, vector<128x256xbf16>, vector<8x256xf32> -> vector<8x256xf32>
    %13 = vector.broadcast %0 : vector<1x256xf32> to vector<8x256xf32>
    %14 = arith.addf %12, %13 : vector<8x256xf32>
    %cst_11 = arith.constant 0.000000e+00 : f32
    %15 = vector.broadcast %cst_11 : f32 to vector<2x64xf32>
    %16 = vector.extract_strided_slice %14 {offsets = [0, 0], sizes = [2, 256], strides = [1, 1]} : vector<8x256xf32> to vector<2x256xf32>
    %17 = vector.extract_strided_slice %16 {offsets = [0, 0], sizes = [2, 192], strides = [1, 1]} : vector<2x256xf32> to vector<2x192xf32>
    %cst_12 = arith.constant 5.000000e-01 : f32
    %18 = vector.broadcast %cst_12 : f32 to vector<2x192xf32>
    %19 = arith.mulf %18, %17 : vector<2x192xf32>
    %20 = math.tanh %19 : vector<2x192xf32>
    %cst_13 = arith.constant 5.000000e-01 : f32
    %21 = vector.broadcast %cst_13 : f32 to vector<2x192xf32>
    %22 = arith.mulf %21, %20 : vector<2x192xf32>
    %cst_14 = arith.constant 5.000000e-01 : f32
    %23 = vector.broadcast %cst_14 : f32 to vector<2x192xf32>
    %24 = arith.addf %22, %23 : vector<2x192xf32>
    %25 = vector.extract_strided_slice %24 {offsets = [0, 0], sizes = [2, 64], strides = [1, 1]} : vector<2x192xf32> to vector<2x64xf32>
    %26 = vector.extract_strided_slice %24 {offsets = [0, 64], sizes = [2, 64], strides = [1, 1]} : vector<2x192xf32> to vector<2x64xf32>
    %27 = vector.extract_strided_slice %24 {offsets = [0, 128], sizes = [2, 64], strides = [1, 1]} : vector<2x192xf32> to vector<2x64xf32>
    %28 = vector.extract_strided_slice %16 {offsets = [0, 192], sizes = [2, 64], strides = [1, 1]} : vector<2x256xf32> to vector<2x64xf32>
    %29 = math.tanh %28 : vector<2x64xf32>
    %30 = arith.mulf %26, %15 : vector<2x64xf32>
    %31 = arith.mulf %25, %29 : vector<2x64xf32>
    %32 = arith.addf %30, %31 : vector<2x64xf32>
    %33 = math.tanh %32 : vector<2x64xf32>
    %34 = arith.mulf %27, %33 : vector<2x64xf32>
    %35 = vector.extract_strided_slice %14 {offsets = [2, 0], sizes = [2, 256], strides = [1, 1]} : vector<8x256xf32> to vector<2x256xf32>
    %36 = arith.truncf %34 : vector<2x64xf32> to vector<2x64xbf16>
    %c0_15 = arith.constant 0 : index
    %c0_16 = arith.constant 0 : index
    %37 = vector.load %arg4[%c0_15, %c0_16] : memref<64x256xbf16, #tpu.memory_space<vmem>>, vector<64x256xbf16>
    %cst_17 = arith.constant dense<0.000000e+00> : vector<2x256xf32>
    %38 = tpu.matmul %36, %37, %cst_17 {dimension_numbers = #tpu.dot_dimension_numbers<[1], [0], [0], [1], [0, 0, 1, 1], [], []>} : vector<2x64xbf16>, vector<64x256xbf16>, vector<2x256xf32> -> vector<2x256xf32>
    %39 = arith.addf %35, %38 : vector<2x256xf32>
    %40 = vector.extract_strided_slice %39 {offsets = [0, 0], sizes = [2, 192], strides = [1, 1]} : vector<2x256xf32> to vector<2x192xf32>
    %cst_18 = arith.constant 5.000000e-01 : f32
    %41 = vector.broadcast %cst_18 : f32 to vector<2x192xf32>
    %42 = arith.mulf %41, %40 : vector<2x192xf32>
    %43 = math.tanh %42 : vector<2x192xf32>
    %cst_19 = arith.constant 5.000000e-01 : f32
    %44 = vector.broadcast %cst_19 : f32 to vector<2x192xf32>
    %45 = arith.mulf %44, %43 : vector<2x192xf32>
    %cst_20 = arith.constant 5.000000e-01 : f32
    %46 = vector.broadcast %cst_20 : f32 to vector<2x192xf32>
    %47 = arith.addf %45, %46 : vector<2x192xf32>
    %48 = vector.extract_strided_slice %47 {offsets = [0, 0], sizes = [2, 64], strides = [1, 1]} : vector<2x192xf32> to vector<2x64xf32>
    %49 = vector.extract_strided_slice %47 {offsets = [0, 64], sizes = [2, 64], strides = [1, 1]} : vector<2x192xf32> to vector<2x64xf32>
    %50 = vector.extract_strided_slice %47 {offsets = [0, 128], sizes = [2, 64], strides = [1, 1]} : vector<2x192xf32> to vector<2x64xf32>
    %51 = vector.extract_strided_slice %39 {offsets = [0, 192], sizes = [2, 64], strides = [1, 1]} : vector<2x256xf32> to vector<2x64xf32>
    %52 = math.tanh %51 : vector<2x64xf32>
    %53 = arith.mulf %49, %32 : vector<2x64xf32>
    %54 = arith.mulf %48, %52 : vector<2x64xf32>
    %55 = arith.addf %53, %54 : vector<2x64xf32>
    %56 = math.tanh %55 : vector<2x64xf32>
    %57 = arith.mulf %50, %56 : vector<2x64xf32>
    %58 = vector.extract_strided_slice %14 {offsets = [4, 0], sizes = [2, 256], strides = [1, 1]} : vector<8x256xf32> to vector<2x256xf32>
    %59 = arith.truncf %57 : vector<2x64xf32> to vector<2x64xbf16>
    %c0_21 = arith.constant 0 : index
    %c0_22 = arith.constant 0 : index
    %60 = vector.load %arg4[%c0_21, %c0_22] : memref<64x256xbf16, #tpu.memory_space<vmem>>, vector<64x256xbf16>
    %cst_23 = arith.constant dense<0.000000e+00> : vector<2x256xf32>
    %61 = tpu.matmul %59, %60, %cst_23 {dimension_numbers = #tpu.dot_dimension_numbers<[1], [0], [0], [1], [0, 0, 1, 1], [], []>} : vector<2x64xbf16>, vector<64x256xbf16>, vector<2x256xf32> -> vector<2x256xf32>
    %62 = arith.addf %58, %61 : vector<2x256xf32>
    %63 = vector.extract_strided_slice %62 {offsets = [0, 0], sizes = [2, 192], strides = [1, 1]} : vector<2x256xf32> to vector<2x192xf32>
    %cst_24 = arith.constant 5.000000e-01 : f32
    %64 = vector.broadcast %cst_24 : f32 to vector<2x192xf32>
    %65 = arith.mulf %64, %63 : vector<2x192xf32>
    %66 = math.tanh %65 : vector<2x192xf32>
    %cst_25 = arith.constant 5.000000e-01 : f32
    %67 = vector.broadcast %cst_25 : f32 to vector<2x192xf32>
    %68 = arith.mulf %67, %66 : vector<2x192xf32>
    %cst_26 = arith.constant 5.000000e-01 : f32
    %69 = vector.broadcast %cst_26 : f32 to vector<2x192xf32>
    %70 = arith.addf %68, %69 : vector<2x192xf32>
    %71 = vector.extract_strided_slice %70 {offsets = [0, 0], sizes = [2, 64], strides = [1, 1]} : vector<2x192xf32> to vector<2x64xf32>
    %72 = vector.extract_strided_slice %70 {offsets = [0, 64], sizes = [2, 64], strides = [1, 1]} : vector<2x192xf32> to vector<2x64xf32>
    %73 = vector.extract_strided_slice %70 {offsets = [0, 128], sizes = [2, 64], strides = [1, 1]} : vector<2x192xf32> to vector<2x64xf32>
    %74 = vector.extract_strided_slice %62 {offsets = [0, 192], sizes = [2, 64], strides = [1, 1]} : vector<2x256xf32> to vector<2x64xf32>
    %75 = math.tanh %74 : vector<2x64xf32>
    %76 = arith.mulf %72, %55 : vector<2x64xf32>
    %77 = arith.mulf %71, %75 : vector<2x64xf32>
    %78 = arith.addf %76, %77 : vector<2x64xf32>
    %79 = math.tanh %78 : vector<2x64xf32>
    %80 = arith.mulf %73, %79 : vector<2x64xf32>
    %81 = vector.extract_strided_slice %14 {offsets = [6, 0], sizes = [2, 256], strides = [1, 1]} : vector<8x256xf32> to vector<2x256xf32>
    %82 = arith.truncf %80 : vector<2x64xf32> to vector<2x64xbf16>
    %c0_27 = arith.constant 0 : index
    %c0_28 = arith.constant 0 : index
    %83 = vector.load %arg4[%c0_27, %c0_28] : memref<64x256xbf16, #tpu.memory_space<vmem>>, vector<64x256xbf16>
    %cst_29 = arith.constant dense<0.000000e+00> : vector<2x256xf32>
    %84 = tpu.matmul %82, %83, %cst_29 {dimension_numbers = #tpu.dot_dimension_numbers<[1], [0], [0], [1], [0, 0, 1, 1], [], []>} : vector<2x64xbf16>, vector<64x256xbf16>, vector<2x256xf32> -> vector<2x256xf32>
    %85 = arith.addf %81, %84 : vector<2x256xf32>
    %86 = vector.extract_strided_slice %85 {offsets = [0, 0], sizes = [2, 192], strides = [1, 1]} : vector<2x256xf32> to vector<2x192xf32>
    %cst_30 = arith.constant 5.000000e-01 : f32
    %87 = vector.broadcast %cst_30 : f32 to vector<2x192xf32>
    %88 = arith.mulf %87, %86 : vector<2x192xf32>
    %89 = math.tanh %88 : vector<2x192xf32>
    %cst_31 = arith.constant 5.000000e-01 : f32
    %90 = vector.broadcast %cst_31 : f32 to vector<2x192xf32>
    %91 = arith.mulf %90, %89 : vector<2x192xf32>
    %cst_32 = arith.constant 5.000000e-01 : f32
    %92 = vector.broadcast %cst_32 : f32 to vector<2x192xf32>
    %93 = arith.addf %91, %92 : vector<2x192xf32>
    %94 = vector.extract_strided_slice %93 {offsets = [0, 0], sizes = [2, 64], strides = [1, 1]} : vector<2x192xf32> to vector<2x64xf32>
    %95 = vector.extract_strided_slice %93 {offsets = [0, 64], sizes = [2, 64], strides = [1, 1]} : vector<2x192xf32> to vector<2x64xf32>
    %96 = vector.extract_strided_slice %93 {offsets = [0, 128], sizes = [2, 64], strides = [1, 1]} : vector<2x192xf32> to vector<2x64xf32>
    %97 = vector.extract_strided_slice %85 {offsets = [0, 192], sizes = [2, 64], strides = [1, 1]} : vector<2x256xf32> to vector<2x64xf32>
    %98 = math.tanh %97 : vector<2x64xf32>
    %99 = arith.mulf %95, %78 : vector<2x64xf32>
    %100 = arith.mulf %94, %98 : vector<2x64xf32>
    %101 = arith.addf %99, %100 : vector<2x64xf32>
    %102 = math.tanh %101 : vector<2x64xf32>
    %103 = arith.mulf %96, %102 : vector<2x64xf32>
    %c0_33 = arith.constant 0 : index
    %c0_34 = arith.constant 0 : index
    %104 = vector.load %arg7[%c0_33, %c0_34] : memref<1x34xf32, #tpu.memory_space<vmem>>, vector<1x34xf32>
    %c6 = arith.constant 6 : index
    %c0_35 = arith.constant 0 : index
    %105 = vector.load %arg0[%c6, %c0_35] : memref<8x34xf32, #tpu.memory_space<vmem>>, vector<2x34xf32>
    %106 = arith.truncf %103 : vector<2x64xf32> to vector<2x64xbf16>
    %c0_36 = arith.constant 0 : index
    %c0_37 = arith.constant 0 : index
    %107 = vector.load %arg6[%c0_36, %c0_37] : memref<64x384xbf16, #tpu.memory_space<vmem>>, vector<64x384xbf16>
    %cst_38 = arith.constant dense<0.000000e+00> : vector<2x384xf32>
    %108 = tpu.matmul %106, %107, %cst_38 {dimension_numbers = #tpu.dot_dimension_numbers<[1], [0], [0], [1], [0, 0, 1, 1], [], []>} : vector<2x64xbf16>, vector<64x384xbf16>, vector<2x384xf32> -> vector<2x384xf32>
    %109 = vector.extract_strided_slice %108 {offsets = [0, 256], sizes = [2, 34], strides = [1, 1]} : vector<2x384xf32> to vector<2x34xf32>
    %110 = vector.broadcast %104 : vector<1x34xf32> to vector<2x34xf32>
    %111 = arith.addf %109, %110 : vector<2x34xf32>
    %112 = arith.addf %111, %105 : vector<2x34xf32>
    %113 = vector.extract_strided_slice %108 {offsets = [0, 0], sizes = [2, 256], strides = [1, 1]} : vector<2x384xf32> to vector<2x256xf32>
    %114 = vector.broadcast %0 : vector<1x256xf32> to vector<2x256xf32>
    %115 = arith.addf %113, %114 : vector<2x256xf32>
    %116 = vector.extract_strided_slice %115 {offsets = [0, 0], sizes = [2, 192], strides = [1, 1]} : vector<2x256xf32> to vector<2x192xf32>
    %cst_39 = arith.constant 5.000000e-01 : f32
    %117 = vector.broadcast %cst_39 : f32 to vector<2x192xf32>
    %118 = arith.mulf %117, %116 : vector<2x192xf32>
    %119 = math.tanh %118 : vector<2x192xf32>
    %cst_40 = arith.constant 5.000000e-01 : f32
    %120 = vector.broadcast %cst_40 : f32 to vector<2x192xf32>
    %121 = arith.mulf %120, %119 : vector<2x192xf32>
    %cst_41 = arith.constant 5.000000e-01 : f32
    %122 = vector.broadcast %cst_41 : f32 to vector<2x192xf32>
    %123 = arith.addf %121, %122 : vector<2x192xf32>
    %124 = vector.extract_strided_slice %123 {offsets = [0, 0], sizes = [2, 64], strides = [1, 1]} : vector<2x192xf32> to vector<2x64xf32>
    %125 = vector.extract_strided_slice %123 {offsets = [0, 64], sizes = [2, 64], strides = [1, 1]} : vector<2x192xf32> to vector<2x64xf32>
    %126 = vector.extract_strided_slice %123 {offsets = [0, 128], sizes = [2, 64], strides = [1, 1]} : vector<2x192xf32> to vector<2x64xf32>
    %127 = vector.extract_strided_slice %115 {offsets = [0, 192], sizes = [2, 64], strides = [1, 1]} : vector<2x256xf32> to vector<2x64xf32>
    %128 = math.tanh %127 : vector<2x64xf32>
    %129 = arith.mulf %125, %101 : vector<2x64xf32>
    %130 = arith.mulf %124, %128 : vector<2x64xf32>
    %131 = arith.addf %129, %130 : vector<2x64xf32>
    %132 = math.tanh %131 : vector<2x64xf32>
    %133 = arith.mulf %126, %132 : vector<2x64xf32>
    %134 = arith.truncf %133 : vector<2x64xf32> to vector<2x64xbf16>
    %c0_42 = arith.constant 0 : index
    %c0_43 = arith.constant 0 : index
    %135 = vector.load %arg6[%c0_42, %c0_43] : memref<64x384xbf16, #tpu.memory_space<vmem>>, vector<64x384xbf16>
    %cst_44 = arith.constant dense<0.000000e+00> : vector<2x384xf32>
    %136 = tpu.matmul %134, %135, %cst_44 {dimension_numbers = #tpu.dot_dimension_numbers<[1], [0], [0], [1], [0, 0, 1, 1], [], []>} : vector<2x64xbf16>, vector<64x384xbf16>, vector<2x384xf32> -> vector<2x384xf32>
    %137 = vector.extract_strided_slice %136 {offsets = [0, 256], sizes = [2, 34], strides = [1, 1]} : vector<2x384xf32> to vector<2x34xf32>
    %138 = vector.broadcast %104 : vector<1x34xf32> to vector<2x34xf32>
    %139 = arith.addf %137, %138 : vector<2x34xf32>
    %140 = arith.addf %139, %112 : vector<2x34xf32>
    %141 = vector.extract_strided_slice %136 {offsets = [0, 0], sizes = [2, 256], strides = [1, 1]} : vector<2x384xf32> to vector<2x256xf32>
    %142 = vector.broadcast %0 : vector<1x256xf32> to vector<2x256xf32>
    %143 = arith.addf %141, %142 : vector<2x256xf32>
    %144 = vector.extract_strided_slice %143 {offsets = [0, 0], sizes = [2, 192], strides = [1, 1]} : vector<2x256xf32> to vector<2x192xf32>
    %cst_45 = arith.constant 5.000000e-01 : f32
    %145 = vector.broadcast %cst_45 : f32 to vector<2x192xf32>
    %146 = arith.mulf %145, %144 : vector<2x192xf32>
    %147 = math.tanh %146 : vector<2x192xf32>
    %cst_46 = arith.constant 5.000000e-01 : f32
    %148 = vector.broadcast %cst_46 : f32 to vector<2x192xf32>
    %149 = arith.mulf %148, %147 : vector<2x192xf32>
    %cst_47 = arith.constant 5.000000e-01 : f32
    %150 = vector.broadcast %cst_47 : f32 to vector<2x192xf32>
    %151 = arith.addf %149, %150 : vector<2x192xf32>
    %152 = vector.extract_strided_slice %151 {offsets = [0, 0], sizes = [2, 64], strides = [1, 1]} : vector<2x192xf32> to vector<2x64xf32>
    %153 = vector.extract_strided_slice %151 {offsets = [0, 64], sizes = [2, 64], strides = [1, 1]} : vector<2x192xf32> to vector<2x64xf32>
    %154 = vector.extract_strided_slice %151 {offsets = [0, 128], sizes = [2, 64], strides = [1, 1]} : vector<2x192xf32> to vector<2x64xf32>
    %155 = vector.extract_strided_slice %143 {offsets = [0, 192], sizes = [2, 64], strides = [1, 1]} : vector<2x256xf32> to vector<2x64xf32>
    %156 = math.tanh %155 : vector<2x64xf32>
    %157 = arith.mulf %153, %131 : vector<2x64xf32>
    %158 = arith.mulf %152, %156 : vector<2x64xf32>
    %159 = arith.addf %157, %158 : vector<2x64xf32>
    %160 = math.tanh %159 : vector<2x64xf32>
    %161 = arith.mulf %154, %160 : vector<2x64xf32>
    %162 = arith.truncf %161 : vector<2x64xf32> to vector<2x64xbf16>
    %c0_48 = arith.constant 0 : index
    %c0_49 = arith.constant 0 : index
    %163 = vector.load %arg6[%c0_48, %c0_49] : memref<64x384xbf16, #tpu.memory_space<vmem>>, vector<64x384xbf16>
    %cst_50 = arith.constant dense<0.000000e+00> : vector<2x384xf32>
    %164 = tpu.matmul %162, %163, %cst_50 {dimension_numbers = #tpu.dot_dimension_numbers<[1], [0], [0], [1], [0, 0, 1, 1], [], []>} : vector<2x64xbf16>, vector<64x384xbf16>, vector<2x384xf32> -> vector<2x384xf32>
    %165 = vector.extract_strided_slice %164 {offsets = [0, 256], sizes = [2, 34], strides = [1, 1]} : vector<2x384xf32> to vector<2x34xf32>
    %166 = vector.broadcast %104 : vector<1x34xf32> to vector<2x34xf32>
    %167 = arith.addf %165, %166 : vector<2x34xf32>
    %168 = arith.addf %167, %140 : vector<2x34xf32>
    %169 = vector.extract_strided_slice %164 {offsets = [0, 0], sizes = [2, 256], strides = [1, 1]} : vector<2x384xf32> to vector<2x256xf32>
    %170 = vector.broadcast %0 : vector<1x256xf32> to vector<2x256xf32>
    %171 = arith.addf %169, %170 : vector<2x256xf32>
    %172 = vector.extract_strided_slice %171 {offsets = [0, 0], sizes = [2, 192], strides = [1, 1]} : vector<2x256xf32> to vector<2x192xf32>
    %cst_51 = arith.constant 5.000000e-01 : f32
    %173 = vector.broadcast %cst_51 : f32 to vector<2x192xf32>
    %174 = arith.mulf %173, %172 : vector<2x192xf32>
    %175 = math.tanh %174 : vector<2x192xf32>
    %cst_52 = arith.constant 5.000000e-01 : f32
    %176 = vector.broadcast %cst_52 : f32 to vector<2x192xf32>
    %177 = arith.mulf %176, %175 : vector<2x192xf32>
    %cst_53 = arith.constant 5.000000e-01 : f32
    %178 = vector.broadcast %cst_53 : f32 to vector<2x192xf32>
    %179 = arith.addf %177, %178 : vector<2x192xf32>
    %180 = vector.extract_strided_slice %179 {offsets = [0, 0], sizes = [2, 64], strides = [1, 1]} : vector<2x192xf32> to vector<2x64xf32>
    %181 = vector.extract_strided_slice %179 {offsets = [0, 64], sizes = [2, 64], strides = [1, 1]} : vector<2x192xf32> to vector<2x64xf32>
    %182 = vector.extract_strided_slice %179 {offsets = [0, 128], sizes = [2, 64], strides = [1, 1]} : vector<2x192xf32> to vector<2x64xf32>
    %183 = vector.extract_strided_slice %171 {offsets = [0, 192], sizes = [2, 64], strides = [1, 1]} : vector<2x256xf32> to vector<2x64xf32>
    %184 = math.tanh %183 : vector<2x64xf32>
    %185 = arith.mulf %181, %159 : vector<2x64xf32>
    %186 = arith.mulf %180, %184 : vector<2x64xf32>
    %187 = arith.addf %185, %186 : vector<2x64xf32>
    %188 = math.tanh %187 : vector<2x64xf32>
    %189 = arith.mulf %182, %188 : vector<2x64xf32>
    %190 = arith.truncf %189 : vector<2x64xf32> to vector<2x64xbf16>
    %c0_54 = arith.constant 0 : index
    %c0_55 = arith.constant 0 : index
    %191 = vector.load %arg6[%c0_54, %c0_55] : memref<64x384xbf16, #tpu.memory_space<vmem>>, vector<64x384xbf16>
    %cst_56 = arith.constant dense<0.000000e+00> : vector<2x384xf32>
    %192 = tpu.matmul %190, %191, %cst_56 {dimension_numbers = #tpu.dot_dimension_numbers<[1], [0], [0], [1], [0, 0, 1, 1], [], []>} : vector<2x64xbf16>, vector<64x384xbf16>, vector<2x384xf32> -> vector<2x384xf32>
    %193 = vector.extract_strided_slice %192 {offsets = [0, 256], sizes = [2, 34], strides = [1, 1]} : vector<2x384xf32> to vector<2x34xf32>
    %194 = vector.broadcast %104 : vector<1x34xf32> to vector<2x34xf32>
    %195 = arith.addf %193, %194 : vector<2x34xf32>
    %196 = arith.addf %195, %168 : vector<2x34xf32>
    %197 = vector.extract_strided_slice %192 {offsets = [0, 0], sizes = [2, 256], strides = [1, 1]} : vector<2x384xf32> to vector<2x256xf32>
    %198 = vector.broadcast %0 : vector<1x256xf32> to vector<2x256xf32>
    %199 = arith.addf %197, %198 : vector<2x256xf32>
    %200 = vector.extract_strided_slice %199 {offsets = [0, 0], sizes = [2, 192], strides = [1, 1]} : vector<2x256xf32> to vector<2x192xf32>
    %cst_57 = arith.constant 5.000000e-01 : f32
    %201 = vector.broadcast %cst_57 : f32 to vector<2x192xf32>
    %202 = arith.mulf %201, %200 : vector<2x192xf32>
    %203 = math.tanh %202 : vector<2x192xf32>
    %cst_58 = arith.constant 5.000000e-01 : f32
    %204 = vector.broadcast %cst_58 : f32 to vector<2x192xf32>
    %205 = arith.mulf %204, %203 : vector<2x192xf32>
    %cst_59 = arith.constant 5.000000e-01 : f32
    %206 = vector.broadcast %cst_59 : f32 to vector<2x192xf32>
    %207 = arith.addf %205, %206 : vector<2x192xf32>
    %208 = vector.extract_strided_slice %207 {offsets = [0, 0], sizes = [2, 64], strides = [1, 1]} : vector<2x192xf32> to vector<2x64xf32>
    %209 = vector.extract_strided_slice %207 {offsets = [0, 64], sizes = [2, 64], strides = [1, 1]} : vector<2x192xf32> to vector<2x64xf32>
    %210 = vector.extract_strided_slice %207 {offsets = [0, 128], sizes = [2, 64], strides = [1, 1]} : vector<2x192xf32> to vector<2x64xf32>
    %211 = vector.extract_strided_slice %199 {offsets = [0, 192], sizes = [2, 64], strides = [1, 1]} : vector<2x256xf32> to vector<2x64xf32>
    %212 = math.tanh %211 : vector<2x64xf32>
    %213 = arith.mulf %209, %187 : vector<2x64xf32>
    %214 = arith.mulf %208, %212 : vector<2x64xf32>
    %215 = arith.addf %213, %214 : vector<2x64xf32>
    %216 = math.tanh %215 : vector<2x64xf32>
    %217 = arith.mulf %210, %216 : vector<2x64xf32>
    %218 = arith.truncf %217 : vector<2x64xf32> to vector<2x64xbf16>
    %c0_60 = arith.constant 0 : index
    %c0_61 = arith.constant 0 : index
    %219 = vector.load %arg6[%c0_60, %c0_61] : memref<64x384xbf16, #tpu.memory_space<vmem>>, vector<64x384xbf16>
    %cst_62 = arith.constant dense<0.000000e+00> : vector<2x384xf32>
    %220 = tpu.matmul %218, %219, %cst_62 {dimension_numbers = #tpu.dot_dimension_numbers<[1], [0], [0], [1], [0, 0, 1, 1], [], []>} : vector<2x64xbf16>, vector<64x384xbf16>, vector<2x384xf32> -> vector<2x384xf32>
    %221 = vector.extract_strided_slice %220 {offsets = [0, 256], sizes = [2, 34], strides = [1, 1]} : vector<2x384xf32> to vector<2x34xf32>
    %222 = vector.broadcast %104 : vector<1x34xf32> to vector<2x34xf32>
    %223 = arith.addf %221, %222 : vector<2x34xf32>
    %224 = arith.addf %223, %196 : vector<2x34xf32>
    %225 = vector.extract_strided_slice %220 {offsets = [0, 0], sizes = [2, 256], strides = [1, 1]} : vector<2x384xf32> to vector<2x256xf32>
    %226 = vector.broadcast %0 : vector<1x256xf32> to vector<2x256xf32>
    %227 = arith.addf %225, %226 : vector<2x256xf32>
    %228 = vector.extract_strided_slice %227 {offsets = [0, 0], sizes = [2, 192], strides = [1, 1]} : vector<2x256xf32> to vector<2x192xf32>
    %cst_63 = arith.constant 5.000000e-01 : f32
    %229 = vector.broadcast %cst_63 : f32 to vector<2x192xf32>
    %230 = arith.mulf %229, %228 : vector<2x192xf32>
    %231 = math.tanh %230 : vector<2x192xf32>
    %cst_64 = arith.constant 5.000000e-01 : f32
    %232 = vector.broadcast %cst_64 : f32 to vector<2x192xf32>
    %233 = arith.mulf %232, %231 : vector<2x192xf32>
    %cst_65 = arith.constant 5.000000e-01 : f32
    %234 = vector.broadcast %cst_65 : f32 to vector<2x192xf32>
    %235 = arith.addf %233, %234 : vector<2x192xf32>
    %236 = vector.extract_strided_slice %235 {offsets = [0, 0], sizes = [2, 64], strides = [1, 1]} : vector<2x192xf32> to vector<2x64xf32>
    %237 = vector.extract_strided_slice %235 {offsets = [0, 64], sizes = [2, 64], strides = [1, 1]} : vector<2x192xf32> to vector<2x64xf32>
    %238 = vector.extract_strided_slice %235 {offsets = [0, 128], sizes = [2, 64], strides = [1, 1]} : vector<2x192xf32> to vector<2x64xf32>
    %239 = vector.extract_strided_slice %227 {offsets = [0, 192], sizes = [2, 64], strides = [1, 1]} : vector<2x256xf32> to vector<2x64xf32>
    %240 = math.tanh %239 : vector<2x64xf32>
    %241 = arith.mulf %237, %215 : vector<2x64xf32>
    %242 = arith.mulf %236, %240 : vector<2x64xf32>
    %243 = arith.addf %241, %242 : vector<2x64xf32>
    %244 = math.tanh %243 : vector<2x64xf32>
    %245 = arith.mulf %238, %244 : vector<2x64xf32>
    %246 = arith.truncf %245 : vector<2x64xf32> to vector<2x64xbf16>
    %c0_66 = arith.constant 0 : index
    %c256 = arith.constant 256 : index
    %247 = vector.load %arg6[%c0_66, %c256] : memref<64x384xbf16, #tpu.memory_space<vmem>>, vector<64x128xbf16>
    %cst_67 = arith.constant dense<0.000000e+00> : vector<2x128xf32>
    %248 = tpu.matmul %246, %247, %cst_67 {dimension_numbers = #tpu.dot_dimension_numbers<[1], [0], [0], [1], [0, 0, 1, 1], [], []>} : vector<2x64xbf16>, vector<64x128xbf16>, vector<2x128xf32> -> vector<2x128xf32>
    %249 = vector.extract_strided_slice %248 {offsets = [0, 0], sizes = [2, 34], strides = [1, 1]} : vector<2x128xf32> to vector<2x34xf32>
    %250 = vector.broadcast %104 : vector<1x34xf32> to vector<2x34xf32>
    %251 = arith.addf %249, %250 : vector<2x34xf32>
    %252 = arith.addf %251, %224 : vector<2x34xf32>
    %253 = tpu.concatenate %112, %140, %168, %196, %224, %252 in 1 : vector<2x34xf32>, vector<2x34xf32>, vector<2x34xf32>, vector<2x34xf32>, vector<2x34xf32>, vector<2x34xf32> -> vector<2x204xf32>
    %c0_68 = arith.constant 0 : index
    %c0_69 = arith.constant 0 : index
    %254 = vector.load %arg8[%c0_68, %c0_69] : memref<2x204xf32, #tpu.memory_space<vmem>>, vector<2x204xf32>
    tpu.vector_store %arg8[%c0_68, %c0_69], %253 {strides = array<i32>} : memref<2x204xf32, #tpu.memory_space<vmem>>, vector<2x204xf32>,
    return
  }
}

</mosaic_0001>

<llo_original>
// kernel: tpu_custom_call.1
$region0: #{tpu_custom_call.1}
  #allocation0 [shape = 'u32[]', space=smem, size = 0x4, offset = 0x4, fixed_abs, tag = 'smem constant byte address 0x4 - core index']
  #allocation1 [shape = 'u32[144,128]{1,0:T(1,128)}', space=vmem, size = 0x12000, scoped, tag = 'internal scratch']
  %s0 = inlined_call_operand.hbm [shape: f32[8,34], index: 0, kind: input, shape index: {}]
  %s1 = inlined_call_operand.hbm [shape: bf16[34,128], index: 1, kind: input, shape index: {}]
  %s2 = inlined_call_operand.vmem [shape: f32[1,128], index: 2, kind: input, shape index: {}]
  %s3 = inlined_call_operand.hbm [shape: bf16[128,256], index: 3, kind: input, shape index: {}]
  %s4 = inlined_call_operand.hbm [shape: bf16[64,256], index: 4, kind: input, shape index: {}]
  %s5 = inlined_call_operand.vmem [shape: f32[1,256], index: 5, kind: input, shape index: {}]
  %s6 = inlined_call_operand.hbm [shape: bf16[64,384], index: 6, kind: input, shape index: {}]
  %s7 = inlined_call_operand.vmem [shape: f32[1,34], index: 7, kind: input, shape index: {}]
  %s8 = inlined_call_operand.hbm [shape: f32[2,204], index: 8, kind: output, shape index: {}]
  %s9 = sld [smem:[#allocation0]]
  $region62: #{tpu_custom_call.1} parent=0
    _
  %s11 = ssub.s32 1, %s9
  %s12 = scalar_select 0, %s11, %s9
  $region1: #{tpu_custom_call.1} parent=0
    #allocation2 [shape = 'u8[4096]{0}', space=vmem, size = 0x1000, scoped, tag = 'input window, operand 0, single buffered']
    #allocation3 [shape = 's32[1]{0}', space=sflag, size = 0x4, scoped, tag = 'scoped memory for tpu_custom_call.1']
    #allocation4 [shape = 's32[1]{0}', space=sflag, size = 0x4, scoped, tag = 'scoped memory for tpu_custom_call.1']
    #allocation5 [shape = 'u8[10240]{0}', space=vmem, size = 0x2800, scoped, tag = 'input window, operand 1, single buffered']
    #allocation6 [shape = 's32[1]{0}', space=sflag, size = 0x4, scoped, tag = 'scoped memory for tpu_custom_call.1']
    #allocation7 [shape = 'u8[65536]{0}', space=vmem, size = 0x10000, scoped, tag = 'input window, operand 3, single buffered']
    #allocation8 [shape = 'u8[32768]{0}', space=vmem, size = 0x8000, scoped, tag = 'input window, operand 4, single buffered']
    #allocation9 [shape = 's32[1]{0}', space=sflag, size = 0x4, scoped, tag = 'scoped memory for tpu_custom_call.1']
    #allocation10 [shape = 'u8[49152]{0}', space=vmem, size = 0xc000, scoped, tag = 'input window, operand 6, single buffered']
    #allocation11 [shape = 'u8[2048]{0}', space=vmem, size = 0x800, scoped, tag = 'output window, operand 0, single buffered']
    %13 = vsyncpa [#allocation3], 0
    %14 = vsyncpa [#allocation6], 0
    %15 = vsyncpa [#allocation9], 0
    %16 = vsyncpa [#allocation4], 0
    // Predicated region
    $region2: #{tpu_custom_call.1} parent=1 // pred_check
      _
    $region3: #{tpu_custom_call.1} parent=1 // pred_check_branch
      %18 = sbr.rel (0) target = $region5
    $region4: #{tpu_custom_call.1} parent=1 // pred_region
      %s20 = ssub.s32 128, 128
      %21 = vsyncadd [#allocation3], %s20
      %s23 = sshll.u32 [#allocation2], 4
      %s24 = int_to_ptr.vmem [resolvable:$true] %s23
      %26 = dma.hbm_to_vmem [thread:$0]  %s0, 128, %s24, [#allocation3]
    $region5: #{tpu_custom_call.1} parent=1 // pred_fallthru
      _
    // Predicated region
    $region6: #{tpu_custom_call.1} parent=1 // pred_check
      _
    $region7: #{tpu_custom_call.1} parent=1 // pred_check_branch
      %28 = sbr.rel (0) target = $region9
    $region8: #{tpu_custom_call.1} parent=1 // pred_region
      %s30 = ssub.s32 320, 320
      %31 = vsyncadd [#allocation6], %s30
      %s32 = sshll.u32 [#allocation5], 4
      %s33 = int_to_ptr.vmem [resolvable:$true] %s32
      %38 = dma.hbm_to_vmem [thread:$0]  %s1, 320, %s33, [#allocation6], 64, 64, 4
    $region9: #{tpu_custom_call.1} parent=1 // pred_fallthru
      _
    // Predicated region
    $region10: #{tpu_custom_call.1} parent=1 // pred_check
      _
    $region11: #{tpu_custom_call.1} parent=1 // pred_check_branch
      %40 = sbr.rel (0) target = $region13
    $region12: #{tpu_custom_call.1} parent=1 // pred_region
      _
    $region13: #{tpu_custom_call.1} parent=1 // pred_fallthru
      _
    // Predicated region
    $region14: #{tpu_custom_call.1} parent=1 // pred_check
      _
    $region15: #{tpu_custom_call.1} parent=1 // pred_check_branch
      %42 = sbr.rel (0) target = $region17
    $region16: #{tpu_custom_call.1} parent=1 // pred_region
      %s44 = ssub.s32 2048, 2048
      %45 = vsyncadd [#allocation6], %s44
      %s46 = sshll.u32 [#allocation7], 4
      %s47 = int_to_ptr.vmem [resolvable:$true] %s46
      %52 = dma.hbm_to_vmem [thread:$0]  %s3, 2048, %s47, [#allocation6], 128, 128, 8
    $region17: #{tpu_custom_call.1} parent=1 // pred_fallthru
      _
    // Predicated region
    $region18: #{tpu_custom_call.1} parent=1 // pred_check
      _
    $region19: #{tpu_custom_call.1} parent=1 // pred_check_branch
      %54 = sbr.rel (0) target = $region21
    $region20: #{tpu_custom_call.1} parent=1 // pred_region
      %s56 = ssub.s32 1024, 1024
      %57 = vsyncadd [#allocation9], %s56
      %s58 = sshll.u32 [#allocation8], 4
      %s59 = int_to_ptr.vmem [resolvable:$true] %s58
      %64 = dma.hbm_to_vmem [thread:$0]  %s4, 1024, %s59, [#allocation9], 128, 128, 8
    $region21: #{tpu_custom_call.1} parent=1 // pred_fallthru
      _
    // Predicated region
    $region22: #{tpu_custom_call.1} parent=1 // pred_check
      _
    $region23: #{tpu_custom_call.1} parent=1 // pred_check_branch
      %66 = sbr.rel (0) target = $region25
    $region24: #{tpu_custom_call.1} parent=1 // pred_region
      _
    $region25: #{tpu_custom_call.1} parent=1 // pred_fallthru
      _
    // Predicated region
    $region26: #{tpu_custom_call.1} parent=1 // pred_check
      _
    $region27: #{tpu_custom_call.1} parent=1 // pred_check_branch
      %68 = sbr.rel (0) target = $region29
    $region28: #{tpu_custom_call.1} parent=1 // pred_region
      %s70 = ssub.s32 1536, 1536
      %71 = vsyncadd [#allocation9], %s70
      %s72 = sshll.u32 [#allocation10], 4
      %s73 = int_to_ptr.vmem [resolvable:$true] %s72
      %78 = dma.hbm_to_vmem [thread:$0]  %s6, 1536, %s73, [#allocation9], 192, 192, 12
    $region29: #{tpu_custom_call.1} parent=1 // pred_fallthru
      _
    // Predicated region
    $region30: #{tpu_custom_call.1} parent=1 // pred_check
      _
    $region31: #{tpu_custom_call.1} parent=1 // pred_check_branch
      %80 = sbr.rel (0) target = $region33
    $region32: #{tpu_custom_call.1} parent=1 // pred_region
      _
    $region33: #{tpu_custom_call.1} parent=1 // pred_fallthru
      _
    // Predicated region
    $region34: #{tpu_custom_call.1} parent=1 // pred_check
      _
    $region35: #{tpu_custom_call.1} parent=1 // pred_check_branch
      %82 = sbr.rel (0) target = $region37
    $region36: #{tpu_custom_call.1} parent=1 // pred_region
      %83 = dma.done [#allocation3], 128
    $region37: #{tpu_custom_call.1} parent=1 // pred_fallthru
      _
    // Predicated region
    $region38: #{tpu_custom_call.1} parent=1 // pred_check
      _
    $region39: #{tpu_custom_call.1} parent=1 // pred_check_branch
      %85 = sbr.rel (0) target = $region41
    $region40: #{tpu_custom_call.1} parent=1 // pred_region
      %86 = dma.done [#allocation6], 320
    $region41: #{tpu_custom_call.1} parent=1 // pred_fallthru
      _
    // Predicated region
    $region42: #{tpu_custom_call.1} parent=1 // pred_check
      _
    $region43: #{tpu_custom_call.1} parent=1 // pred_check_branch
      %88 = sbr.rel (0) target = $region45
    $region44: #{tpu_custom_call.1} parent=1 // pred_region
      %89 = dma.done [#allocation6], 2048
    $region45: #{tpu_custom_call.1} parent=1 // pred_fallthru
      _
    // Predicated region
    $region46: #{tpu_custom_call.1} parent=1 // pred_check
      _
    $region47: #{tpu_custom_call.1} parent=1 // pred_check_branch
      %91 = sbr.rel (0) target = $region49
    $region48: #{tpu_custom_call.1} parent=1 // pred_region
      %92 = dma.done [#allocation9], 1024
    $region49: #{tpu_custom_call.1} parent=1 // pred_fallthru
      _
    // Predicated region
    $region50: #{tpu_custom_call.1} parent=1 // pred_check
      _
    $region51: #{tpu_custom_call.1} parent=1 // pred_check_branch
      %94 = sbr.rel (0) target = $region53
    $region52: #{tpu_custom_call.1} parent=1 // pred_region
      %95 = dma.done [#allocation9], 1536
    $region53: #{tpu_custom_call.1} parent=1 // pred_fallthru
      _
    %v97 = vld [vmem:[%s5] sm:$0x3]
    %v98 = vld [vmem:[#allocation2] sm:$0xff]
    %v99 = vpack.c.bf16 %v98, %v98
    %v100 = vld [vmem:[#allocation5] sm:$0xf]
    %v101 = vld [vmem:[#allocation5 + $0x4] sm:$0xf]
    %v102 = vld [vmem:[#allocation5 + $0x8] sm:$0xf]
    %v103 = vld [vmem:[#allocation5 + $0xc] sm:$0xf]
    %v104 = vld [vmem:[#allocation5 + $0x10] sm:$0x1]
    %v105 = vld [vmem:[%s2] sm:$0x1]
    %v107 = vlaneseq
    %v108 = vshrl.u32 %v107, 7
    %v109 = vsub.s32 0, %v108
    %v110 = vrot.slane %v105, %v109
    %v117 = vunpack.c.l.b16 %v100
    %v118 = vunpack.c.l.b16 %v101
    %v119 = vunpack.c.l.b16 %v102
    %v120 = vunpack.c.l.b16 %v103
    %v121 = vunpack.c.l.b16 %v104
    %v122 = vpack.c.b16 %v118, %v117
    %v123 = vpack.c.b16 %v120, %v119
    %v124 = vpack.c.b16 %v121, %v121
    %vm127 = vcmask 277504
    %v129 = vsel %vm127, %v99, 0
    %vm131 = vcmask 1040384
    %v133 = vsel %vm131, %v124, 0
    %135 = vmatprep.subr.bf16.mxu0 0
    %136 = vmatpush1.bf16.msra.mxu0 %v122
    %137 = vmatprep.subr.bf16.mxu0 0
    %138 = vmatpush1.bf16.msra.mxu0 %v123
    %139 = vmatprep.subr.bf16.mxu0 0
    %140 = vmatpush1.bf16.msra.mxu0 %v133
    %141 = vmatprep.subr.bf16.mxu0 0
    %142 = vmatpush1.bf16.msra.mxu0 0
    %143 = vmatprep.subr.bf16.mxu0 0
    %144 = vmatpush1.bf16.msra.mxu0 0
    %145 = vmatprep.subr.bf16.mxu0 0
    %146 = vmatpush1.bf16.msra.mxu0 0
    %147 = vmatprep.subr.bf16.mxu0 0
    %148 = vmatpush1.bf16.msra.mxu0 0
    %149 = vmatprep.subr.bf16.mxu0 0
    %150 = vmatpush1.bf16.msra.mxu0 0
    %151 = vmatprep.subr.bf16.mxu0 0
    %152 = vmatpush1.bf16.msra.mxu0 0
    %153 = vmatprep.subr.bf16.mxu0 0
    %154 = vmatpush1.bf16.msra.mxu0 0
    %155 = vmatprep.subr.bf16.mxu0 0
    %156 = vmatpush1.bf16.msra.mxu0 0
    %157 = vmatprep.subr.bf16.mxu0 0
    %158 = vmatpush1.bf16.msra.mxu0 0
    %159 = vmatprep.subr.bf16.mxu0 0
    %160 = vmatpush1.bf16.msra.mxu0 0
    %161 = vmatprep.subr.bf16.mxu0 0
    %162 = vmatpush1.bf16.msra.mxu0 0
    %163 = vmatprep.subr.bf16.mxu0 0
    %164 = vmatpush1.bf16.msra.mxu0 0
    %165 = vmatprep.subr.bf16.mxu0 0
    %166 = vmatpush1.bf16.msra.mxu0 0
    %167 = vmatprep.mubr.bf16.mxu0 0
    %168 = vmatmul.mubr.bf16.gmra.mrb[0].mxu0 %v129
    %v169 = vpop.f32.mrb[0].mxu0
    %v170 = vadd.f32 %v110, %v169
    %v171 = vpop.f32.mrb[0].mxu0
    %v172 = vpop.f32.mrb[0].mxu0
    %v173 = vpop.f32.mrb[0].mxu0
    %174 = vdwg.mxu0
    %v175 = vmax.f32 %v170, 0.0
    %v176 = vpack.c.bf16 %v175, %v175
    %v177 = vld [vmem:[#allocation7] sm:$0xff]
    %v178 = vld [vmem:[#allocation7 + $0x8] sm:$0xff]
    %v179 = vld [vmem:[#allocation7 + $0x10] sm:$0xff]
    %v180 = vld [vmem:[#allocation7 + $0x18] sm:$0xff]
    %v181 = vld [vmem:[#allocation7 + $0x20] sm:$0xff]
    %v182 = vld [vmem:[#allocation7 + $0x28] sm:$0xff]
    %v183 = vld [vmem:[#allocation7 + $0x30] sm:$0xff]
    %v184 = vld [vmem:[#allocation7 + $0x38] sm:$0xff]
    %v185 = vld [vmem:[#allocation7 + $0x40] sm:$0xff]
    %v186 = vld [vmem:[#allocation7 + $0x48] sm:$0xff]
    %v187 = vld [vmem:[#allocation7 + $0x50] sm:$0xff]
    %v188 = vld [vmem:[#allocation7 + $0x58] sm:$0xff]
    %v189 = vld [vmem:[#allocation7 + $0x60] sm:$0xff]
    %v190 = vld [vmem:[#allocation7 + $0x68] sm:$0xff]
    %v191 = vld [vmem:[#allocation7 + $0x70] sm:$0xff]
    %v192 = vld [vmem:[#allocation7 + $0x78] sm:$0xff]
    %v194 = vlaneseq
    %v195 = vshrl.u32 %v194, 7
    %v196 = vsub.s32 0, %v195
    %v197 = vrot.slane %v97, %v196
    %v198 = vlaneseq
    %v199 = vshrl.u32 %v198, 7
    %v200 = vsub.s32 1, %v199
    %v201 = vrot.slane %v97, %v200
    %v220 = vunpack.c.l.b16 %v177
    %v221 = vunpack.c.h.b16 %v177
    %v222 = vunpack.c.l.b16 %v178
    %v223 = vunpack.c.h.b16 %v178
    %v224 = vunpack.c.l.b16 %v179
    %v225 = vunpack.c.h.b16 %v179
    %v226 = vunpack.c.l.b16 %v180
    %v227 = vunpack.c.h.b16 %v180
    %v228 = vunpack.c.l.b16 %v181
    %v229 = vunpack.c.h.b16 %v181
    %v230 = vunpack.c.l.b16 %v182
    %v231 = vunpack.c.h.b16 %v182
    %v232 = vunpack.c.l.b16 %v183
    %v233 = vunpack.c.h.b16 %v183
    %v234 = vunpack.c.l.b16 %v184
    %v235 = vunpack.c.h.b16 %v184
    %v236 = vunpack.c.l.b16 %v185
    %v237 = vunpack.c.h.b16 %v185
    %v238 = vunpack.c.l.b16 %v186
    %v239 = vunpack.c.h.b16 %v186
    %v240 = vunpack.c.l.b16 %v187
    %v241 = vunpack.c.h.b16 %v187
    %v242 = vunpack.c.l.b16 %v188
    %v243 = vunpack.c.h.b16 %v188
    %v244 = vunpack.c.l.b16 %v189
    %v245 = vunpack.c.h.b16 %v189
    %v246 = vunpack.c.l.b16 %v190
    %v247 = vunpack.c.h.b16 %v190
    %v248 = vunpack.c.l.b16 %v191
    %v249 = vunpack.c.h.b16 %v191
    %v250 = vunpack.c.l.b16 %v192
    %v251 = vunpack.c.h.b16 %v192
    %v252 = vpack.c.b16 %v222, %v220
    %v253 = vpack.c.b16 %v223, %v221
    %v254 = vpack.c.b16 %v226, %v224
    %v255 = vpack.c.b16 %v227, %v225
    %v256 = vpack.c.b16 %v230, %v228
    %v257 = vpack.c.b16 %v231, %v229
    %v258 = vpack.c.b16 %v234, %v232
    %v259 = vpack.c.b16 %v235, %v233
    %v260 = vpack.c.b16 %v238, %v236
    %v261 = vpack.c.b16 %v239, %v237
    %v262 = vpack.c.b16 %v242, %v240
    %v263 = vpack.c.b16 %v243, %v241
    %v264 = vpack.c.b16 %v246, %v244
    %v265 = vpack.c.b16 %v247, %v245
    %v266 = vpack.c.b16 %v250, %v248
    %v267 = vpack.c.b16 %v251, %v249
    %284 = vmatprep.subr.bf16.mxu0 %v253
    %285 = vmatpush1.bf16.msra.mxu0 %v252
    %286 = vmatprep.subr.bf16.mxu0 %v255
    %287 = vmatpush1.bf16.msra.mxu0 %v254
    %288 = vmatprep.subr.bf16.mxu0 %v257
    %289 = vmatpush1.bf16.msra.mxu0 %v256
    %290 = vmatprep.subr.bf16.mxu0 %v259
    %291 = vmatpush1.bf16.msra.mxu0 %v258
    %292 = vmatprep.subr.bf16.mxu0 %v261
    %293 = vmatpush1.bf16.msra.mxu0 %v260
    %294 = vmatprep.subr.bf16.mxu0 %v263
    %295 = vmatpush1.bf16.msra.mxu0 %v262
    %296 = vmatprep.subr.bf16.mxu0 %v265
    %297 = vmatpush1.bf16.msra.mxu0 %v264
    %298 = vmatprep.subr.bf16.mxu0 %v267
    %299 = vmatpush1.bf16.msra.mxu0 %v266
    %300 = vmatprep.subr.bf16.mxu0 0
    %301 = vmatpush1.bf16.msra.mxu0 0
    %302 = vmatprep.subr.bf16.mxu0 0
    %303 = vmatpush1.bf16.msra.mxu0 0
    %304 = vmatprep.subr.bf16.mxu0 0
    %305 = vmatpush1.bf16.msra.mxu0 0
    %306 = vmatprep.subr.bf16.mxu0 0
    %307 = vmatpush1.bf16.msra.mxu0 0
    %308 = vmatprep.subr.bf16.mxu0 0
    %309 = vmatpush1.bf16.msra.mxu0 0
    %310 = vmatprep.subr.bf16.mxu0 0
    %311 = vmatpush1.bf16.msra.mxu0 0
    %312 = vmatprep.subr.bf16.mxu0 0
    %313 = vmatpush1.bf16.msra.mxu0 0
    %314 = vmatprep.subr.bf16.mxu0 0
    %315 = vmatpush1.bf16.msra.mxu0 0
    %316 = vmatprep.mubr.bf16.mxu0 0
    %317 = vmatmul.mubr.bf16.gmra.mrb[0].mxu0 %v176
    %v318 = vpop.f32.mrb[0].mxu0
    %v319 = vadd.f32 %v197, %v318
    %v320 = vpop.f32.mrb[0].mxu0
    %v321 = vadd.f32 %v201, %v320
    %v322 = vpop.f32.mrb[0].mxu0
    %v323 = vpop.f32.mrb[0].mxu0
    %324 = vdwg.mxu0
    %v325 = vmul.f32 %v319, 0.5
    %v326 = vmul.f32 %v321, 0.5
    %v327 = vtanh.pop %v325
    %v328 = vtanh.pop %v326
    %v329 = vmul.f32 %v327, 0.5
    %v330 = vmul.f32 %v328, 0.5
    %v331 = vadd.f32 %v329, 0.5
    %v332 = vadd.f32 %v330, 0.5
    %v333 = vtanh.pop %v321
    %v334 = vmul.f32 %v331, 0.0
    %336 = vrot.lane.b32.xlu0 %v333, 64
    %v337 = vpop.permute.xlu0 %336
    %v339 = vmul.f32 %v331, %v337
    %341 = vrot.lane.b32.xlu0 %v339, 64
    %v342 = vpop.permute.xlu0 %341
    %v344 = vadd.f32 %v334, %v342
    %v345 = vtanh.pop %v344
    %347 = vrot.lane.b32.xlu0 %v345, 64
    %v348 = vpop.permute.xlu0 %347
    %v350 = vmul.f32 %v332, %v348
    %v351 = vpack.c.bf16 %v350, %v350
    %v352 = vld [vmem:[#allocation8] sm:$0xff]
    %v353 = vld [vmem:[#allocation8 + $0x8] sm:$0xff]
    %v354 = vld [vmem:[#allocation8 + $0x10] sm:$0xff]
    %v355 = vld [vmem:[#allocation8 + $0x18] sm:$0xff]
    %v356 = vld [vmem:[#allocation8 + $0x20] sm:$0xff]
    %v357 = vld [vmem:[#allocation8 + $0x28] sm:$0xff]
    %v358 = vld [vmem:[#allocation8 + $0x30] sm:$0xff]
    %v359 = vld [vmem:[#allocation8 + $0x38] sm:$0xff]
    %v368 = vunpack.c.l.b16 %v352
    %v369 = vunpack.c.h.b16 %v352
    %v370 = vunpack.c.l.b16 %v353
    %v371 = vunpack.c.h.b16 %v353
    %v372 = vunpack.c.l.b16 %v354
    %v373 = vunpack.c.h.b16 %v354
    %v374 = vunpack.c.l.b16 %v355
    %v375 = vunpack.c.h.b16 %v355
    %v376 = vunpack.c.l.b16 %v356
    %v377 = vunpack.c.h.b16 %v356
    %v378 = vunpack.c.l.b16 %v357
    %v379 = vunpack.c.h.b16 %v357
    %v380 = vunpack.c.l.b16 %v358
    %v381 = vunpack.c.h.b16 %v358
    %v382 = vunpack.c.l.b16 %v359
    %v383 = vunpack.c.h.b16 %v359
    %v384 = vpack.c.b16 %v370, %v368
    %v385 = vpack.c.b16 %v371, %v369
    %v386 = vpack.c.b16 %v374, %v372
    %v387 = vpack.c.b16 %v375, %v373
    %v388 = vpack.c.b16 %v378, %v376
    %v389 = vpack.c.b16 %v379, %v377
    %v390 = vpack.c.b16 %v382, %v380
    %v391 = vpack.c.b16 %v383, %v381
    %vm400 = vcmask 523264
    %v402 = vsel %vm400, %v351, 0
    %404 = vmatprep.subr.bf16.mxu0 %v385
    %405 = vmatpush1.bf16.msra.mxu0 %v384
    %406 = vmatprep.subr.bf16.mxu0 %v387
    %407 = vmatpush1.bf16.msra.mxu0 %v386
    %408 = vmatprep.subr.bf16.mxu0 %v389
    %409 = vmatpush1.bf16.msra.mxu0 %v388
    %410 = vmatprep.subr.bf16.mxu0 %v391
    %411 = vmatpush1.bf16.msra.mxu0 %v390
    %412 = vmatprep.subr.bf16.mxu0 0
    %413 = vmatpush1.bf16.msra.mxu0 0
    %414 = vmatprep.subr.bf16.mxu0 0
    %415 = vmatpush1.bf16.msra.mxu0 0
    %416 = vmatprep.subr.bf16.mxu0 0
    %417 = vmatpush1.bf16.msra.mxu0 0
    %418 = vmatprep.subr.bf16.mxu0 0
    %419 = vmatpush1.bf16.msra.mxu0 0
    %420 = vmatprep.subr.bf16.mxu0 0
    %421 = vmatpush1.bf16.msra.mxu0 0
    %422 = vmatprep.subr.bf16.mxu0 0
    %423 = vmatpush1.bf16.msra.mxu0 0
    %424 = vmatprep.subr.bf16.mxu0 0
    %425 = vmatpush1.bf16.msra.mxu0 0
    %426 = vmatprep.subr.bf16.mxu0 0
    %427 = vmatpush1.bf16.msra.mxu0 0
    %428 = vmatprep.subr.bf16.mxu0 0
    %429 = vmatpush1.bf16.msra.mxu0 0
    %430 = vmatprep.subr.bf16.mxu0 0
    %431 = vmatpush1.bf16.msra.mxu0 0
    %432 = vmatprep.subr.bf16.mxu0 0
    %433 = vmatpush1.bf16.msra.mxu0 0
    %434 = vmatprep.subr.bf16.mxu0 0
    %435 = vmatpush1.bf16.msra.mxu0 0
    %436 = vmatprep.mubr.bf16.mxu0 0
    %437 = vmatmul.mubr.bf16.gmra.mrb[0].mxu0 %v402
    %v438 = vpop.f32.mrb[0].mxu0
    %v439 = vadd.f32 0.0, %v438
    %v440 = vpop.f32.mrb[0].mxu0
    %v441 = vadd.f32 0.0, %v440
    %v442 = vpop.f32.mrb[0].mxu0
    %v443 = vpop.f32.mrb[0].mxu0
    %444 = vdwg.mxu0
    %v447 = vrot.slane %v439, 6
    %v448 = vrot.slane %v441, 6
    %v451 = vadd.f32 %v319, %v447
    %v452 = vadd.f32 %v321, %v448
    %v453 = vmul.f32 %v451, 0.5
    %v454 = vmul.f32 %v452, 0.5
    %v455 = vtanh.pop %v453
    %v456 = vtanh.pop %v454
    %v457 = vmul.f32 %v455, 0.5
    %v458 = vmul.f32 %v456, 0.5
    %v459 = vadd.f32 %v457, 0.5
    %v460 = vadd.f32 %v458, 0.5
    %v461 = vtanh.pop %v452
    %v463 = vrot.slane %v344, 6
    %v465 = vmul.f32 %v459, %v463
    %467 = vrot.lane.b32.xlu0 %v461, 64
    %v468 = vpop.permute.xlu0 %467
    %v470 = vmul.f32 %v459, %v468
    %472 = vrot.lane.b32.xlu0 %v470, 64
    %v473 = vpop.permute.xlu0 %472
    %v475 = vadd.f32 %v465, %v473
    %v476 = vtanh.pop %v475
    %478 = vrot.lane.b32.xlu0 %v476, 64
    %v479 = vpop.permute.xlu0 %478
    %v481 = vmul.f32 %v460, %v479
    %v482 = vpack.c.bf16 %v481, %v481
    %v484 = vrot.slane %v482, 1
    %v486 = vsel %vm400, %v484, 0
    %488 = vmatprep.subr.bf16.mxu0 %v385
    %489 = vmatpush1.bf16.msra.mxu0 %v384
    %490 = vmatprep.subr.bf16.mxu0 %v387
    %491 = vmatpush1.bf16.msra.mxu0 %v386
    %492 = vmatprep.subr.bf16.mxu0 %v389
    %493 = vmatpush1.bf16.msra.mxu0 %v388
    %494 = vmatprep.subr.bf16.mxu0 %v391
    %495 = vmatpush1.bf16.msra.mxu0 %v390
    %496 = vmatprep.subr.bf16.mxu0 0
    %497 = vmatpush1.bf16.msra.mxu0 0
    %498 = vmatprep.subr.bf16.mxu0 0
    %499 = vmatpush1.bf16.msra.mxu0 0
    %500 = vmatprep.subr.bf16.mxu0 0
    %501 = vmatpush1.bf16.msra.mxu0 0
    %502 = vmatprep.subr.bf16.mxu0 0
    %503 = vmatpush1.bf16.msra.mxu0 0
    %504 = vmatprep.subr.bf16.mxu0 0
    %505 = vmatpush1.bf16.msra.mxu0 0
    %506 = vmatprep.subr.bf16.mxu0 0
    %507 = vmatpush1.bf16.msra.mxu0 0
    %508 = vmatprep.subr.bf16.mxu0 0
    %509 = vmatpush1.bf16.msra.mxu0 0
    %510 = vmatprep.subr.bf16.mxu0 0
    %511 = vmatpush1.bf16.msra.mxu0 0
    %512 = vmatprep.subr.bf16.mxu0 0
    %513 = vmatpush1.bf16.msra.mxu0 0
    %514 = vmatprep.subr.bf16.mxu0 0
    %515 = vmatpush1.bf16.msra.mxu0 0
    %516 = vmatprep.subr.bf16.mxu0 0
    %517 = vmatpush1.bf16.msra.mxu0 0
    %518 = vmatprep.subr.bf16.mxu0 0
    %519 = vmatpush1.bf16.msra.mxu0 0
    %520 = vmatprep.mubr.bf16.mxu0 0
    %521 = vmatmul.mubr.bf16.gmra.mrb[0].mxu0 %v486
    %v522 = vpop.f32.mrb[0].mxu0
    %v523 = vadd.f32 0.0, %v522
    %v524 = vpop.f32.mrb[0].mxu0
    %v525 = vadd.f32 0.0, %v524
    %v526 = vpop.f32.mrb[0].mxu0
    %v527 = vpop.f32.mrb[0].mxu0
    %528 = vdwg.mxu0
    %v531 = vrot.slane %v523, 4
    %v532 = vrot.slane %v525, 4
    %v535 = vadd.f32 %v319, %v531
    %v536 = vadd.f32 %v321, %v532
    %v537 = vmul.f32 %v535, 0.5
    %v538 = vmul.f32 %v536, 0.5
    %v539 = vtanh.pop %v537
    %v540 = vtanh.pop %v538
    %v541 = vmul.f32 %v539, 0.5
    %v542 = vmul.f32 %v540, 0.5
    %v543 = vadd.f32 %v541, 0.5
    %v544 = vadd.f32 %v542, 0.5
    %v545 = vtanh.pop %v536
    %v547 = vrot.slane %v475, 6
    %v549 = vmul.f32 %v543, %v547
    %551 = vrot.lane.b32.xlu0 %v545, 64
    %v552 = vpop.permute.xlu0 %551
    %v554 = vmul.f32 %v543, %v552
    %556 = vrot.lane.b32.xlu0 %v554, 64
    %v557 = vpop.permute.xlu0 %556
    %v559 = vadd.f32 %v549, %v557
    %v560 = vtanh.pop %v559
    %562 = vrot.lane.b32.xlu0 %v560, 64
    %v563 = vpop.permute.xlu0 %562
    %v565 = vmul.f32 %v544, %v563
    %v566 = vpack.c.bf16 %v565, %v565
    %v568 = vrot.slane %v566, 2
    %v570 = vsel %vm400, %v568, 0
    %572 = vmatprep.subr.bf16.mxu0 %v385
    %573 = vmatpush1.bf16.msra.mxu0 %v384
    %574 = vmatprep.subr.bf16.mxu0 %v387
    %575 = vmatpush1.bf16.msra.mxu0 %v386
    %576 = vmatprep.subr.bf16.mxu0 %v389
    %577 = vmatpush1.bf16.msra.mxu0 %v388
    %578 = vmatprep.subr.bf16.mxu0 %v391
    %579 = vmatpush1.bf16.msra.mxu0 %v390
    %580 = vmatprep.subr.bf16.mxu0 0
    %581 = vmatpush1.bf16.msra.mxu0 0
    %582 = vmatprep.subr.bf16.mxu0 0
    %583 = vmatpush1.bf16.msra.mxu0 0
    %584 = vmatprep.subr.bf16.mxu0 0
    %585 = vmatpush1.bf16.msra.mxu0 0
    %586 = vmatprep.subr.bf16.mxu0 0
    %587 = vmatpush1.bf16.msra.mxu0 0
    %588 = vmatprep.subr.bf16.mxu0 0
    %589 = vmatpush1.bf16.msra.mxu0 0
    %590 = vmatprep.subr.bf16.mxu0 0
    %591 = vmatpush1.bf16.msra.mxu0 0
    %592 = vmatprep.subr.bf16.mxu0 0
    %593 = vmatpush1.bf16.msra.mxu0 0
    %594 = vmatprep.subr.bf16.mxu0 0
    %595 = vmatpush1.bf16.msra.mxu0 0
    %596 = vmatprep.subr.bf16.mxu0 0
    %597 = vmatpush1.bf16.msra.mxu0 0
    %598 = vmatprep.subr.bf16.mxu0 0
    %599 = vmatpush1.bf16.msra.mxu0 0
    %600 = vmatprep.subr.bf16.mxu0 0
    %601 = vmatpush1.bf16.msra.mxu0 0
    %602 = vmatprep.subr.bf16.mxu0 0
    %603 = vmatpush1.bf16.msra.mxu0 0
    %604 = vmatprep.mubr.bf16.mxu0 0
    %605 = vmatmul.mubr.bf16.gmra.mrb[0].mxu0 %v570
    %v606 = vpop.f32.mrb[0].mxu0
    %v607 = vadd.f32 0.0, %v606
    %v608 = vpop.f32.mrb[0].mxu0
    %v609 = vadd.f32 0.0, %v608
    %v610 = vpop.f32.mrb[0].mxu0
    %v611 = vpop.f32.mrb[0].mxu0
    %612 = vdwg.mxu0
    %v615 = vrot.slane %v607, 2
    %v616 = vrot.slane %v609, 2
    %v619 = vadd.f32 %v319, %v615
    %v620 = vadd.f32 %v321, %v616
    %v621 = vmul.f32 %v619, 0.5
    %v622 = vmul.f32 %v620, 0.5
    %v623 = vtanh.pop %v621
    %v624 = vtanh.pop %v622
    %v625 = vmul.f32 %v623, 0.5
    %v626 = vmul.f32 %v624, 0.5
    %v627 = vadd.f32 %v625, 0.5
    %v628 = vadd.f32 %v626, 0.5
    %v629 = vtanh.pop %v620
    %v631 = vrot.slane %v559, 6
    %v633 = vmul.f32 %v627, %v631
    %635 = vrot.lane.b32.xlu0 %v629, 64
    %v636 = vpop.permute.xlu0 %635
    %v638 = vmul.f32 %v627, %v636
    %640 = vrot.lane.b32.xlu0 %v638, 64
    %v641 = vpop.permute.xlu0 %640
    %v643 = vadd.f32 %v633, %v641
    %v644 = vtanh.pop %v643
    %646 = vrot.lane.b32.xlu0 %v644, 64
    %v647 = vpop.permute.xlu0 %646
    %v649 = vmul.f32 %v628, %v647
    %v650 = vld [vmem:[%s7] sm:$0x1]
    %v651 = vld [vmem:[#allocation2 + $0x6] sm:$0x3]
    %v652 = vpack.c.bf16 %v649, %v649
    %v653 = vld [vmem:[#allocation10] sm:$0xff]
    %v654 = vld [vmem:[#allocation10 + $0x8] sm:$0xf]
    %v655 = vld [vmem:[#allocation10 + $0xc] sm:$0xff]
    %v656 = vld [vmem:[#allocation10 + $0x14] sm:$0xf]
    %v657 = vld [vmem:[#allocation10 + $0x18] sm:$0xff]
    %v658 = vld [vmem:[#allocation10 + $0x20] sm:$0xf]
    %v659 = vld [vmem:[#allocation10 + $0x24] sm:$0xff]
    %v660 = vld [vmem:[#allocation10 + $0x2c] sm:$0xf]
    %v661 = vld [vmem:[#allocation10 + $0x30] sm:$0xff]
    %v662 = vld [vmem:[#allocation10 + $0x38] sm:$0xf]
    %v663 = vld [vmem:[#allocation10 + $0x3c] sm:$0xff]
    %v664 = vld [vmem:[#allocation10 + $0x44] sm:$0xf]
    %v665 = vld [vmem:[#allocation10 + $0x48] sm:$0xff]
    %v666 = vld [vmem:[#allocation10 + $0x50] sm:$0xf]
    %v667 = vld [vmem:[#allocation10 + $0x54] sm:$0xff]
    %v668 = vld [vmem:[#allocation10 + $0x5c] sm:$0xf]
    %v670 = vrot.slane %v652, 3
    %v687 = vunpack.c.l.b16 %v653
    %v688 = vunpack.c.h.b16 %v653
    %v689 = vunpack.c.l.b16 %v654
    %v690 = vunpack.c.l.b16 %v655
    %v691 = vunpack.c.h.b16 %v655
    %v692 = vunpack.c.l.b16 %v656
    %v693 = vunpack.c.l.b16 %v657
    %v694 = vunpack.c.h.b16 %v657
    %v695 = vunpack.c.l.b16 %v658
    %v696 = vunpack.c.l.b16 %v659
    %v697 = vunpack.c.h.b16 %v659
    %v698 = vunpack.c.l.b16 %v660
    %v699 = vunpack.c.l.b16 %v661
    %v700 = vunpack.c.h.b16 %v661
    %v701 = vunpack.c.l.b16 %v662
    %v702 = vunpack.c.l.b16 %v663
    %v703 = vunpack.c.h.b16 %v663
    %v704 = vunpack.c.l.b16 %v664
    %v705 = vunpack.c.l.b16 %v665
    %v706 = vunpack.c.h.b16 %v665
    %v707 = vunpack.c.l.b16 %v666
    %v708 = vunpack.c.l.b16 %v667
    %v709 = vunpack.c.h.b16 %v667
    %v710 = vunpack.c.l.b16 %v668
    %v711 = vpack.c.b16 %v690, %v687
    %v712 = vpack.c.b16 %v691, %v688
    %v713 = vpack.c.b16 %v692, %v689
    %v714 = vpack.c.b16 %v696, %v693
    %v715 = vpack.c.b16 %v697, %v694
    %v716 = vpack.c.b16 %v698, %v695
    %v717 = vpack.c.b16 %v702, %v699
    %v718 = vpack.c.b16 %v703, %v700
    %v719 = vpack.c.b16 %v704, %v701
    %v720 = vpack.c.b16 %v708, %v705
    %v721 = vpack.c.b16 %v709, %v706
    %v722 = vpack.c.b16 %v710, %v707
    %v736 = vsel %vm400, %v670, 0
    %738 = vmatprep.subr.bf16.mxu0 %v712
    %739 = vmatpush1.bf16.msra.mxu0 %v711
    %740 = vmatprep.subr.bf16.mxu0 %v715
    %741 = vmatpush1.bf16.msra.mxu0 %v714
    %742 = vmatprep.subr.bf16.mxu0 %v718
    %743 = vmatpush1.bf16.msra.mxu0 %v717
    %744 = vmatprep.subr.bf16.mxu0 %v721
    %745 = vmatpush1.bf16.msra.mxu0 %v720
    %746 = vmatprep.subr.bf16.mxu0 0
    %747 = vmatpush1.bf16.msra.mxu0 0
    %748 = vmatprep.subr.bf16.mxu0 0
    %749 = vmatpush1.bf16.msra.mxu0 0
    %750 = vmatprep.subr.bf16.mxu0 0
    %751 = vmatpush1.bf16.msra.mxu0 0
    %752 = vmatprep.subr.bf16.mxu0 0
    %753 = vmatpush1.bf16.msra.mxu0 0
    %754 = vmatprep.subr.bf16.mxu0 0
    %755 = vmatpush1.bf16.msra.mxu0 0
    %756 = vmatprep.subr.bf16.mxu0 0
    %757 = vmatpush1.bf16.msra.mxu0 0
    %758 = vmatprep.subr.bf16.mxu0 0
    %759 = vmatpush1.bf16.msra.mxu0 0
    %760 = vmatprep.subr.bf16.mxu0 0
    %761 = vmatpush1.bf16.msra.mxu0 0
    %762 = vmatprep.subr.bf16.mxu0 0
    %763 = vmatpush1.bf16.msra.mxu0 0
    %764 = vmatprep.subr.bf16.mxu0 0
    %765 = vmatpush1.bf16.msra.mxu0 0
    %766 = vmatprep.subr.bf16.mxu0 0
    %767 = vmatpush1.bf16.msra.mxu0 0
    %768 = vmatprep.subr.bf16.mxu0 0
    %769 = vmatpush1.bf16.msra.mxu0 0
    %770 = vmatprep.mubr.bf16.mxu0 0
    %771 = vmatmul.mubr.bf16.gmra.mrb[0].mxu0 %v736
    %v772 = vpop.f32.mrb[0].mxu0
    %v773 = vadd.f32 0.0, %v772
    %v774 = vpop.f32.mrb[0].mxu0
    %v775 = vadd.f32 0.0, %v774
    %v776 = vpop.f32.mrb[0].mxu0
    %v777 = vpop.f32.mrb[0].mxu0
    %778 = vdwg.mxu0
    %779 = vmatprep.subr.bf16.mxu0 0
    %780 = vmatpush1.bf16.msra.mxu0 %v713
    %781 = vmatprep.subr.bf16.mxu0 0
    %782 = vmatpush1.bf16.msra.mxu0 %v716
    %783 = vmatprep.subr.bf16.mxu0 0
    %784 = vmatpush1.bf16.msra.mxu0 %v719
    %785 = vmatprep.subr.bf16.mxu0 0
    %786 = vmatpush1.bf16.msra.mxu0 %v722
    %787 = vmatprep.subr.bf16.mxu0 0
    %788 = vmatpush1.bf16.msra.mxu0 0
    %789 = vmatprep.subr.bf16.mxu0 0
    %790 = vmatpush1.bf16.msra.mxu0 0
    %791 = vmatprep.subr.bf16.mxu0 0
    %792 = vmatpush1.bf16.msra.mxu0 0
    %793 = vmatprep.subr.bf16.mxu0 0
    %794 = vmatpush1.bf16.msra.mxu0 0
    %795 = vmatprep.subr.bf16.mxu0 0
    %796 = vmatpush1.bf16.msra.mxu0 0
    %797 = vmatprep.subr.bf16.mxu0 0
    %798 = vmatpush1.bf16.msra.mxu0 0
    %799 = vmatprep.subr.bf16.mxu0 0
    %800 = vmatpush1.bf16.msra.mxu0 0
    %801 = vmatprep.subr.bf16.mxu0 0
    %802 = vmatpush1.bf16.msra.mxu0 0
    %803 = vmatprep.subr.bf16.mxu0 0
    %804 = vmatpush1.bf16.msra.mxu0 0
    %805 = vmatprep.subr.bf16.mxu0 0
    %806 = vmatpush1.bf16.msra.mxu0 0
    %807 = vmatprep.subr.bf16.mxu0 0
    %808 = vmatpush1.bf16.msra.mxu0 0
    %809 = vmatprep.subr.bf16.mxu0 0
    %810 = vmatpush1.bf16.msra.mxu0 0
    %811 = vmatprep.mubr.bf16.mxu0 0
    %812 = vmatmul.mubr.bf16.gmra.mrb[0].mxu0 %v736
    %v813 = vpop.f32.mrb[0].mxu0
    %v814 = vadd.f32 0.0, %v813
    %v815 = vpop.f32.mrb[0].mxu0
    %v816 = vpop.f32.mrb[0].mxu0
    %v817 = vpop.f32.mrb[0].mxu0
    %818 = vdwg.mxu0
    %v820 = vlaneseq
    %v821 = vshrl.u32 %v820, 7
    %v822 = vsub.s32 0, %v821
    %v823 = vrot.slane %v650, %v822
    %v825 = vadd.f32 %v814, %v823
    %v826 = vadd.f32 %v825, %v651
    %v827 = vadd.f32 %v773, %v197
    %v828 = vadd.f32 %v775, %v201
    %v829 = vmul.f32 %v827, 0.5
    %v830 = vmul.f32 %v828, 0.5
    %v831 = vtanh.pop %v829
    %v832 = vtanh.pop %v830
    %v833 = vmul.f32 %v831, 0.5
    %v834 = vmul.f32 %v832, 0.5
    %v835 = vadd.f32 %v833, 0.5
    %v836 = vadd.f32 %v834, 0.5
    %v837 = vtanh.pop %v828
    %v839 = vrot.slane %v643, 6
    %v841 = vmul.f32 %v835, %v839
    %843 = vrot.lane.b32.xlu0 %v837, 64
    %v844 = vpop.permute.xlu0 %843
    %v846 = vmul.f32 %v835, %v844
    %848 = vrot.lane.b32.xlu0 %v846, 64
    %v849 = vpop.permute.xlu0 %848
    %v851 = vadd.f32 %v841, %v849
    %v852 = vtanh.pop %v851
    %854 = vrot.lane.b32.xlu0 %v852, 64
    %v855 = vpop.permute.xlu0 %854
    %v857 = vmul.f32 %v836, %v855
    %v858 = vpack.c.bf16 %v857, %v857
    %v860 = vsel %vm400, %v858, 0
    %862 = vmatprep.subr.bf16.mxu0 %v712
    %863 = vmatpush1.bf16.msra.mxu0 %v711
    %864 = vmatprep.subr.bf16.mxu0 %v715
    %865 = vmatpush1.bf16.msra.mxu0 %v714
    %866 = vmatprep.subr.bf16.mxu0 %v718
    %867 = vmatpush1.bf16.msra.mxu0 %v717
    %868 = vmatprep.subr.bf16.mxu0 %v721
    %869 = vmatpush1.bf16.msra.mxu0 %v720
    %870 = vmatprep.subr.bf16.mxu0 0
    %871 = vmatpush1.bf16.msra.mxu0 0
    %872 = vmatprep.subr.bf16.mxu0 0
    %873 = vmatpush1.bf16.msra.mxu0 0
    %874 = vmatprep.subr.bf16.mxu0 0
    %875 = vmatpush1.bf16.msra.mxu0 0
    %876 = vmatprep.subr.bf16.mxu0 0
    %877 = vmatpush1.bf16.msra.mxu0 0
    %878 = vmatprep.subr.bf16.mxu0 0
    %879 = vmatpush1.bf16.msra.mxu0 0
    %880 = vmatprep.subr.bf16.mxu0 0
    %881 = vmatpush1.bf16.msra.mxu0 0
    %882 = vmatprep.subr.bf16.mxu0 0
    %883 = vmatpush1.bf16.msra.mxu0 0
    %884 = vmatprep.subr.bf16.mxu0 0
    %885 = vmatpush1.bf16.msra.mxu0 0
    %886 = vmatprep.subr.bf16.mxu0 0
    %887 = vmatpush1.bf16.msra.mxu0 0
    %888 = vmatprep.subr.bf16.mxu0 0
    %889 = vmatpush1.bf16.msra.mxu0 0
    %890 = vmatprep.subr.bf16.mxu0 0
    %891 = vmatpush1.bf16.msra.mxu0 0
    %892 = vmatprep.subr.bf16.mxu0 0
    %893 = vmatpush1.bf16.msra.mxu0 0
    %894 = vmatprep.mubr.bf16.mxu0 0
    %895 = vmatmul.mubr.bf16.gmra.mrb[0].mxu0 %v860
    %v896 = vpop.f32.mrb[0].mxu0
    %v897 = vadd.f32 0.0, %v896
    %v898 = vpop.f32.mrb[0].mxu0
    %v899 = vadd.f32 0.0, %v898
    %v900 = vpop.f32.mrb[0].mxu0
    %v901 = vpop.f32.mrb[0].mxu0
    %902 = vdwg.mxu0
    %903 = vmatprep.subr.bf16.mxu0 0
    %904 = vmatpush1.bf16.msra.mxu0 %v713
    %905 = vmatprep.subr.bf16.mxu0 0
    %906 = vmatpush1.bf16.msra.mxu0 %v716
    %907 = vmatprep.subr.bf16.mxu0 0
    %908 = vmatpush1.bf16.msra.mxu0 %v719
    %909 = vmatprep.subr.bf16.mxu0 0
    %910 = vmatpush1.bf16.msra.mxu0 %v722
    %911 = vmatprep.subr.bf16.mxu0 0
    %912 = vmatpush1.bf16.msra.mxu0 0
    %913 = vmatprep.subr.bf16.mxu0 0
    %914 = vmatpush1.bf16.msra.mxu0 0
    %915 = vmatprep.subr.bf16.mxu0 0
    %916 = vmatpush1.bf16.msra.mxu0 0
    %917 = vmatprep.subr.bf16.mxu0 0
    %918 = vmatpush1.bf16.msra.mxu0 0
    %919 = vmatprep.subr.bf16.mxu0 0
    %920 = vmatpush1.bf16.msra.mxu0 0
    %921 = vmatprep.subr.bf16.mxu0 0
    %922 = vmatpush1.bf16.msra.mxu0 0
    %923 = vmatprep.subr.bf16.mxu0 0
    %924 = vmatpush1.bf16.msra.mxu0 0
    %925 = vmatprep.subr.bf16.mxu0 0
    %926 = vmatpush1.bf16.msra.mxu0 0
    %927 = vmatprep.subr.bf16.mxu0 0
    %928 = vmatpush1.bf16.msra.mxu0 0
    %929 = vmatprep.subr.bf16.mxu0 0
    %930 = vmatpush1.bf16.msra.mxu0 0
    %931 = vmatprep.subr.bf16.mxu0 0
    %932 = vmatpush1.bf16.msra.mxu0 0
    %933 = vmatprep.subr.bf16.mxu0 0
    %934 = vmatpush1.bf16.msra.mxu0 0
    %935 = vmatprep.mubr.bf16.mxu0 0
    %936 = vmatmul.mubr.bf16.gmra.mrb[0].mxu0 %v860
    %v937 = vpop.f32.mrb[0].mxu0
    %v938 = vadd.f32 0.0, %v937
    %v939 = vpop.f32.mrb[0].mxu0
    %v940 = vpop.f32.mrb[0].mxu0
    %v941 = vpop.f32.mrb[0].mxu0
    %942 = vdwg.mxu0
    %v943 = vadd.f32 %v938, %v823
    %v944 = vadd.f32 %v943, %v826
    %v945 = vadd.f32 %v897, %v197
    %v946 = vadd.f32 %v899, %v201
    %v947 = vmul.f32 %v945, 0.5
    %v948 = vmul.f32 %v946, 0.5
    %v949 = vtanh.pop %v947
    %v950 = vtanh.pop %v948
    %v951 = vmul.f32 %v949, 0.5
    %v952 = vmul.f32 %v950, 0.5
    %v953 = vadd.f32 %v951, 0.5
    %v954 = vadd.f32 %v952, 0.5
    %v955 = vtanh.pop %v946
    %v956 = vmul.f32 %v953, %v851
    %958 = vrot.lane.b32.xlu0 %v955, 64
    %v959 = vpop.permute.xlu0 %958
    %v961 = vmul.f32 %v953, %v959
    %963 = vrot.lane.b32.xlu0 %v961, 64
    %v964 = vpop.permute.xlu0 %963
    %v966 = vadd.f32 %v956, %v964
    %v967 = vtanh.pop %v966
    %969 = vrot.lane.b32.xlu0 %v967, 64
    %v970 = vpop.permute.xlu0 %969
    %v972 = vmul.f32 %v954, %v970
    %v973 = vpack.c.bf16 %v972, %v972
    %v975 = vsel %vm400, %v973, 0
    %977 = vmatprep.subr.bf16.mxu0 %v712
    %978 = vmatpush1.bf16.msra.mxu0 %v711
    %979 = vmatprep.subr.bf16.mxu0 %v715
    %980 = vmatpush1.bf16.msra.mxu0 %v714
    %981 = vmatprep.subr.bf16.mxu0 %v718
    %982 = vmatpush1.bf16.msra.mxu0 %v717
    %983 = vmatprep.subr.bf16.mxu0 %v721
    %984 = vmatpush1.bf16.msra.mxu0 %v720
    %985 = vmatprep.subr.bf16.mxu0 0
    %986 = vmatpush1.bf16.msra.mxu0 0
    %987 = vmatprep.subr.bf16.mxu0 0
    %988 = vmatpush1.bf16.msra.mxu0 0
    %989 = vmatprep.subr.bf16.mxu0 0
    %990 = vmatpush1.bf16.msra.mxu0 0
    %991 = vmatprep.subr.bf16.mxu0 0
    %992 = vmatpush1.bf16.msra.mxu0 0
    %993 = vmatprep.subr.bf16.mxu0 0
    %994 = vmatpush1.bf16.msra.mxu0 0
    %995 = vmatprep.subr.bf16.mxu0 0
    %996 = vmatpush1.bf16.msra.mxu0 0
    %997 = vmatprep.subr.bf16.mxu0 0
    %998 = vmatpush1.bf16.msra.mxu0 0
    %999 = vmatprep.subr.bf16.mxu0 0
    %1000 = vmatpush1.bf16.msra.mxu0 0
    %1001 = vmatprep.subr.bf16.mxu0 0
    %1002 = vmatpush1.bf16.msra.mxu0 0
    %1003 = vmatprep.subr.bf16.mxu0 0
    %1004 = vmatpush1.bf16.msra.mxu0 0
    %1005 = vmatprep.subr.bf16.mxu0 0
    %1006 = vmatpush1.bf16.msra.mxu0 0
    %1007 = vmatprep.subr.bf16.mxu0 0
    %1008 = vmatpush1.bf16.msra.mxu0 0
    %1009 = vmatprep.mubr.bf16.mxu0 0
    %1010 = vmatmul.mubr.bf16.gmra.mrb[0].mxu0 %v975
    %v1011 = vpop.f32.mrb[0].mxu0
    %v1012 = vadd.f32 0.0, %v1011
    %v1013 = vpop.f32.mrb[0].mxu0
    %v1014 = vadd.f32 0.0, %v1013
    %v1015 = vpop.f32.mrb[0].mxu0
    %v1016 = vpop.f32.mrb[0].mxu0
    %1017 = vdwg.mxu0
    %1018 = vmatprep.subr.bf16.mxu0 0
    %1019 = vmatpush1.bf16.msra.mxu0 %v713
    %1020 = vmatprep.subr.bf16.mxu0 0
    %1021 = vmatpush1.bf16.msra.mxu0 %v716
    %1022 = vmatprep.subr.bf16.mxu0 0
    %1023 = vmatpush1.bf16.msra.mxu0 %v719
    %1024 = vmatprep.subr.bf16.mxu0 0
    %1025 = vmatpush1.bf16.msra.mxu0 %v722
    %1026 = vmatprep.subr.bf16.mxu0 0
    %1027 = vmatpush1.bf16.msra.mxu0 0
    %1028 = vmatprep.subr.bf16.mxu0 0
    %1029 = vmatpush1.bf16.msra.mxu0 0
    %1030 = vmatprep.subr.bf16.mxu0 0
    %1031 = vmatpush1.bf16.msra.mxu0 0
    %1032 = vmatprep.subr.bf16.mxu0 0
    %1033 = vmatpush1.bf16.msra.mxu0 0
    %1034 = vmatprep.subr.bf16.mxu0 0
    %1035 = vmatpush1.bf16.msra.mxu0 0
    %1036 = vmatprep.subr.bf16.mxu0 0
    %1037 = vmatpush1.bf16.msra.mxu0 0
    %1038 = vmatprep.subr.bf16.mxu0 0
    %1039 = vmatpush1.bf16.msra.mxu0 0
    %1040 = vmatprep.subr.bf16.mxu0 0
    %1041 = vmatpush1.bf16.msra.mxu0 0
    %1042 = vmatprep.subr.bf16.mxu0 0
    %1043 = vmatpush1.bf16.msra.mxu0 0
    %1044 = vmatprep.subr.bf16.mxu0 0
    %1045 = vmatpush1.bf16.msra.mxu0 0
    %1046 = vmatprep.subr.bf16.mxu0 0
    %1047 = vmatpush1.bf16.msra.mxu0 0
    %1048 = vmatprep.subr.bf16.mxu0 0
    %1049 = vmatpush1.bf16.msra.mxu0 0
    %1050 = vmatprep.mubr.bf16.mxu0 0
    %1051 = vmatmul.mubr.bf16.gmra.mrb[0].mxu0 %v975
    %v1052 = vpop.f32.mrb[0].mxu0
    %v1053 = vadd.f32 0.0, %v1052
    %v1054 = vpop.f32.mrb[0].mxu0
    %v1055 = vpop.f32.mrb[0].mxu0
    %v1056 = vpop.f32.mrb[0].mxu0
    %1057 = vdwg.mxu0
    %v1058 = vadd.f32 %v1053, %v823
    %v1059 = vadd.f32 %v1058, %v944
    %v1060 = vadd.f32 %v1012, %v197
    %v1061 = vadd.f32 %v1014, %v201
    %v1062 = vmul.f32 %v1060, 0.5
    %v1063 = vmul.f32 %v1061, 0.5
    %v1064 = vtanh.pop %v1062
    %v1065 = vtanh.pop %v1063
    %v1066 = vmul.f32 %v1064, 0.5
    %v1067 = vmul.f32 %v1065, 0.5
    %v1068 = vadd.f32 %v1066, 0.5
    %v1069 = vadd.f32 %v1067, 0.5
    %v1070 = vtanh.pop %v1061
    %v1071 = vmul.f32 %v1068, %v966
    %1073 = vrot.lane.b32.xlu0 %v1070, 64
    %v1074 = vpop.permute.xlu0 %1073
    %v1076 = vmul.f32 %v1068, %v1074
    %1078 = vrot.lane.b32.xlu0 %v1076, 64
    %v1079 = vpop.permute.xlu0 %1078
    %v1081 = vadd.f32 %v1071, %v1079
    %v1082 = vtanh.pop %v1081
    %1084 = vrot.lane.b32.xlu0 %v1082, 64
    %v1085 = vpop.permute.xlu0 %1084
    %v1087 = vmul.f32 %v1069, %v1085
    %v1088 = vpack.c.bf16 %v1087, %v1087
    %v1090 = vsel %vm400, %v1088, 0
    %1092 = vmatprep.subr.bf16.mxu0 %v712
    %1093 = vmatpush1.bf16.msra.mxu0 %v711
    %1094 = vmatprep.subr.bf16.mxu0 %v715
    %1095 = vmatpush1.bf16.msra.mxu0 %v714
    %1096 = vmatprep.subr.bf16.mxu0 %v718
    %1097 = vmatpush1.bf16.msra.mxu0 %v717
    %1098 = vmatprep.subr.bf16.mxu0 %v721
    %1099 = vmatpush1.bf16.msra.mxu0 %v720
    %1100 = vmatprep.subr.bf16.mxu0 0
    %1101 = vmatpush1.bf16.msra.mxu0 0
    %1102 = vmatprep.subr.bf16.mxu0 0
    %1103 = vmatpush1.bf16.msra.mxu0 0
    %1104 = vmatprep.subr.bf16.mxu0 0
    %1105 = vmatpush1.bf16.msra.mxu0 0
    %1106 = vmatprep.subr.bf16.mxu0 0
    %1107 = vmatpush1.bf16.msra.mxu0 0
    %1108 = vmatprep.subr.bf16.mxu0 0
    %1109 = vmatpush1.bf16.msra.mxu0 0
    %1110 = vmatprep.subr.bf16.mxu0 0
    %1111 = vmatpush1.bf16.msra.mxu0 0
    %1112 = vmatprep.subr.bf16.mxu0 0
    %1113 = vmatpush1.bf16.msra.mxu0 0
    %1114 = vmatprep.subr.bf16.mxu0 0
    %1115 = vmatpush1.bf16.msra.mxu0 0
    %1116 = vmatprep.subr.bf16.mxu0 0
    %1117 = vmatpush1.bf16.msra.mxu0 0
    %1118 = vmatprep.subr.bf16.mxu0 0
    %1119 = vmatpush1.bf16.msra.mxu0 0
    %1120 = vmatprep.subr.bf16.mxu0 0
    %1121 = vmatpush1.bf16.msra.mxu0 0
    %1122 = vmatprep.subr.bf16.mxu0 0
    %1123 = vmatpush1.bf16.msra.mxu0 0
    %1124 = vmatprep.mubr.bf16.mxu0 0
    %1125 = vmatmul.mubr.bf16.gmra.mrb[0].mxu0 %v1090
    %v1126 = vpop.f32.mrb[0].mxu0
    %v1127 = vadd.f32 0.0, %v1126
    %v1128 = vpop.f32.mrb[0].mxu0
    %v1129 = vadd.f32 0.0, %v1128
    %v1130 = vpop.f32.mrb[0].mxu0
    %v1131 = vpop.f32.mrb[0].mxu0
    %1132 = vdwg.mxu0
    %1133 = vmatprep.subr.bf16.mxu0 0
    %1134 = vmatpush1.bf16.msra.mxu0 %v713
    %1135 = vmatprep.subr.bf16.mxu0 0
    %1136 = vmatpush1.bf16.msra.mxu0 %v716
    %1137 = vmatprep.subr.bf16.mxu0 0
    %1138 = vmatpush1.bf16.msra.mxu0 %v719
    %1139 = vmatprep.subr.bf16.mxu0 0
    %1140 = vmatpush1.bf16.msra.mxu0 %v722
    %1141 = vmatprep.subr.bf16.mxu0 0
    %1142 = vmatpush1.bf16.msra.mxu0 0
    %1143 = vmatprep.subr.bf16.mxu0 0
    %1144 = vmatpush1.bf16.msra.mxu0 0
    %1145 = vmatprep.subr.bf16.mxu0 0
    %1146 = vmatpush1.bf16.msra.mxu0 0
    %1147 = vmatprep.subr.bf16.mxu0 0
    %1148 = vmatpush1.bf16.msra.mxu0 0
    %1149 = vmatprep.subr.bf16.mxu0 0
    %1150 = vmatpush1.bf16.msra.mxu0 0
    %1151 = vmatprep.subr.bf16.mxu0 0
    %1152 = vmatpush1.bf16.msra.mxu0 0
    %1153 = vmatprep.subr.bf16.mxu0 0
    %1154 = vmatpush1.bf16.msra.mxu0 0
    %1155 = vmatprep.subr.bf16.mxu0 0
    %1156 = vmatpush1.bf16.msra.mxu0 0
    %1157 = vmatprep.subr.bf16.mxu0 0
    %1158 = vmatpush1.bf16.msra.mxu0 0
    %1159 = vmatprep.subr.bf16.mxu0 0
    %1160 = vmatpush1.bf16.msra.mxu0 0
    %1161 = vmatprep.subr.bf16.mxu0 0
    %1162 = vmatpush1.bf16.msra.mxu0 0
    %1163 = vmatprep.subr.bf16.mxu0 0
    %1164 = vmatpush1.bf16.msra.mxu0 0
    %1165 = vmatprep.mubr.bf16.mxu0 0
    %1166 = vmatmul.mubr.bf16.gmra.mrb[0].mxu0 %v1090
    %v1167 = vpop.f32.mrb[0].mxu0
    %v1168 = vadd.f32 0.0, %v1167
    %v1169 = vpop.f32.mrb[0].mxu0
    %v1170 = vpop.f32.mrb[0].mxu0
    %v1171 = vpop.f32.mrb[0].mxu0
    %1172 = vdwg.mxu0
    %v1173 = vadd.f32 %v1168, %v823
    %v1174 = vadd.f32 %v1173, %v1059
    %v1175 = vadd.f32 %v1127, %v197
    %v1176 = vadd.f32 %v1129, %v201
    %v1177 = vmul.f32 %v1175, 0.5
    %v1178 = vmul.f32 %v1176, 0.5
    %v1179 = vtanh.pop %v1177
    %v1180 = vtanh.pop %v1178
    %v1181 = vmul.f32 %v1179, 0.5
    %v1182 = vmul.f32 %v1180, 0.5
    %v1183 = vadd.f32 %v1181, 0.5
    %v1184 = vadd.f32 %v1182, 0.5
    %v1185 = vtanh.pop %v1176
    %v1186 = vmul.f32 %v1183, %v1081
    %1188 = vrot.lane.b32.xlu0 %v1185, 64
    %v1189 = vpop.permute.xlu0 %1188
    %v1191 = vmul.f32 %v1183, %v1189
    %1193 = vrot.lane.b32.xlu0 %v1191, 64
    %v1194 = vpop.permute.xlu0 %1193
    %v1196 = vadd.f32 %v1186, %v1194
    %v1197 = vtanh.pop %v1196
    %1199 = vrot.lane.b32.xlu0 %v1197, 64
    %v1200 = vpop.permute.xlu0 %1199
    %v1202 = vmul.f32 %v1184, %v1200
    %v1203 = vpack.c.bf16 %v1202, %v1202
    %v1205 = vsel %vm400, %v1203, 0
    %1207 = vmatprep.subr.bf16.mxu0 %v712
    %1208 = vmatpush1.bf16.msra.mxu0 %v711
    %1209 = vmatprep.subr.bf16.mxu0 %v715
    %1210 = vmatpush1.bf16.msra.mxu0 %v714
    %1211 = vmatprep.subr.bf16.mxu0 %v718
    %1212 = vmatpush1.bf16.msra.mxu0 %v717
    %1213 = vmatprep.subr.bf16.mxu0 %v721
    %1214 = vmatpush1.bf16.msra.mxu0 %v720
    %1215 = vmatprep.subr.bf16.mxu0 0
    %1216 = vmatpush1.bf16.msra.mxu0 0
    %1217 = vmatprep.subr.bf16.mxu0 0
    %1218 = vmatpush1.bf16.msra.mxu0 0
    %1219 = vmatprep.subr.bf16.mxu0 0
    %1220 = vmatpush1.bf16.msra.mxu0 0
    %1221 = vmatprep.subr.bf16.mxu0 0
    %1222 = vmatpush1.bf16.msra.mxu0 0
    %1223 = vmatprep.subr.bf16.mxu0 0
    %1224 = vmatpush1.bf16.msra.mxu0 0
    %1225 = vmatprep.subr.bf16.mxu0 0
    %1226 = vmatpush1.bf16.msra.mxu0 0
    %1227 = vmatprep.subr.bf16.mxu0 0
    %1228 = vmatpush1.bf16.msra.mxu0 0
    %1229 = vmatprep.subr.bf16.mxu0 0
    %1230 = vmatpush1.bf16.msra.mxu0 0
    %1231 = vmatprep.subr.bf16.mxu0 0
    %1232 = vmatpush1.bf16.msra.mxu0 0
    %1233 = vmatprep.subr.bf16.mxu0 0
    %1234 = vmatpush1.bf16.msra.mxu0 0
    %1235 = vmatprep.subr.bf16.mxu0 0
    %1236 = vmatpush1.bf16.msra.mxu0 0
    %1237 = vmatprep.subr.bf16.mxu0 0
    %1238 = vmatpush1.bf16.msra.mxu0 0
    %1239 = vmatprep.mubr.bf16.mxu0 0
    %1240 = vmatmul.mubr.bf16.gmra.mrb[0].mxu0 %v1205
    %v1241 = vpop.f32.mrb[0].mxu0
    %v1242 = vadd.f32 0.0, %v1241
    %v1243 = vpop.f32.mrb[0].mxu0
    %v1244 = vadd.f32 0.0, %v1243
    %v1245 = vpop.f32.mrb[0].mxu0
    %v1246 = vpop.f32.mrb[0].mxu0
    %1247 = vdwg.mxu0
    %1248 = vmatprep.subr.bf16.mxu0 0
    %1249 = vmatpush1.bf16.msra.mxu0 %v713
    %1250 = vmatprep.subr.bf16.mxu0 0
    %1251 = vmatpush1.bf16.msra.mxu0 %v716
    %1252 = vmatprep.subr.bf16.mxu0 0
    %1253 = vmatpush1.bf16.msra.mxu0 %v719
    %1254 = vmatprep.subr.bf16.mxu0 0
    %1255 = vmatpush1.bf16.msra.mxu0 %v722
    %1256 = vmatprep.subr.bf16.mxu0 0
    %1257 = vmatpush1.bf16.msra.mxu0 0
    %1258 = vmatprep.subr.bf16.mxu0 0
    %1259 = vmatpush1.bf16.msra.mxu0 0
    %1260 = vmatprep.subr.bf16.mxu0 0
    %1261 = vmatpush1.bf16.msra.mxu0 0
    %1262 = vmatprep.subr.bf16.mxu0 0
    %1263 = vmatpush1.bf16.msra.mxu0 0
    %1264 = vmatprep.subr.bf16.mxu0 0
    %1265 = vmatpush1.bf16.msra.mxu0 0
    %1266 = vmatprep.subr.bf16.mxu0 0
    %1267 = vmatpush1.bf16.msra.mxu0 0
    %1268 = vmatprep.subr.bf16.mxu0 0
    %1269 = vmatpush1.bf16.msra.mxu0 0
    %1270 = vmatprep.subr.bf16.mxu0 0
    %1271 = vmatpush1.bf16.msra.mxu0 0
    %1272 = vmatprep.subr.bf16.mxu0 0
    %1273 = vmatpush1.bf16.msra.mxu0 0
    %1274 = vmatprep.subr.bf16.mxu0 0
    %1275 = vmatpush1.bf16.msra.mxu0 0
    %1276 = vmatprep.subr.bf16.mxu0 0
    %1277 = vmatpush1.bf16.msra.mxu0 0
    %1278 = vmatprep.subr.bf16.mxu0 0
    %1279 = vmatpush1.bf16.msra.mxu0 0
    %1280 = vmatprep.mubr.bf16.mxu0 0
    %1281 = vmatmul.mubr.bf16.gmra.mrb[0].mxu0 %v1205
    %v1282 = vpop.f32.mrb[0].mxu0
    %v1283 = vadd.f32 0.0, %v1282
    %v1284 = vpop.f32.mrb[0].mxu0
    %v1285 = vpop.f32.mrb[0].mxu0
    %v1286 = vpop.f32.mrb[0].mxu0
    %1287 = vdwg.mxu0
    %v1288 = vadd.f32 %v1283, %v823
    %v1289 = vadd.f32 %v1288, %v1174
    %v1290 = vadd.f32 %v1242, %v197
    %v1291 = vadd.f32 %v1244, %v201
    %v1292 = vmul.f32 %v1290, 0.5
    %v1293 = vmul.f32 %v1291, 0.5
    %v1294 = vtanh.pop %v1292
    %v1295 = vtanh.pop %v1293
    %v1296 = vmul.f32 %v1294, 0.5
    %v1297 = vmul.f32 %v1295, 0.5
    %v1298 = vadd.f32 %v1296, 0.5
    %v1299 = vadd.f32 %v1297, 0.5
    %v1300 = vtanh.pop %v1291
    %v1301 = vmul.f32 %v1298, %v1196
    %1303 = vrot.lane.b32.xlu0 %v1300, 64
    %v1304 = vpop.permute.xlu0 %1303
    %v1306 = vmul.f32 %v1298, %v1304
    %1308 = vrot.lane.b32.xlu0 %v1306, 64
    %v1309 = vpop.permute.xlu0 %1308
    %v1311 = vadd.f32 %v1301, %v1309
    %v1312 = vtanh.pop %v1311
    %1314 = vrot.lane.b32.xlu0 %v1312, 64
    %v1315 = vpop.permute.xlu0 %1314
    %v1317 = vmul.f32 %v1299, %v1315
    %v1318 = vpack.c.bf16 %v1317, %v1317
    %v1320 = vsel %vm400, %v1318, 0
    %1322 = vmatprep.subr.bf16.mxu0 0
    %1323 = vmatpush1.bf16.msra.mxu0 %v713
    %1324 = vmatprep.subr.bf16.mxu0 0
    %1325 = vmatpush1.bf16.msra.mxu0 %v716
    %1326 = vmatprep.subr.bf16.mxu0 0
    %1327 = vmatpush1.bf16.msra.mxu0 %v719
    %1328 = vmatprep.subr.bf16.mxu0 0
    %1329 = vmatpush1.bf16.msra.mxu0 %v722
    %1330 = vmatprep.subr.bf16.mxu0 0
    %1331 = vmatpush1.bf16.msra.mxu0 0
    %1332 = vmatprep.subr.bf16.mxu0 0
    %1333 = vmatpush1.bf16.msra.mxu0 0
    %1334 = vmatprep.subr.bf16.mxu0 0
    %1335 = vmatpush1.bf16.msra.mxu0 0
    %1336 = vmatprep.subr.bf16.mxu0 0
    %1337 = vmatpush1.bf16.msra.mxu0 0
    %1338 = vmatprep.subr.bf16.mxu0 0
    %1339 = vmatpush1.bf16.msra.mxu0 0
    %1340 = vmatprep.subr.bf16.mxu0 0
    %1341 = vmatpush1.bf16.msra.mxu0 0
    %1342 = vmatprep.subr.bf16.mxu0 0
    %1343 = vmatpush1.bf16.msra.mxu0 0
    %1344 = vmatprep.subr.bf16.mxu0 0
    %1345 = vmatpush1.bf16.msra.mxu0 0
    %1346 = vmatprep.subr.bf16.mxu0 0
    %1347 = vmatpush1.bf16.msra.mxu0 0
    %1348 = vmatprep.subr.bf16.mxu0 0
    %1349 = vmatpush1.bf16.msra.mxu0 0
    %1350 = vmatprep.subr.bf16.mxu0 0
    %1351 = vmatpush1.bf16.msra.mxu0 0
    %1352 = vmatprep.subr.bf16.mxu0 0
    %1353 = vmatpush1.bf16.msra.mxu0 0
    %1354 = vmatprep.mubr.bf16.mxu0 0
    %1355 = vmatmul.mubr.bf16.gmra.mrb[0].mxu0 %v1320
    %v1356 = vpop.f32.mrb[0].mxu0
    %v1357 = vadd.f32 0.0, %v1356
    %v1358 = vpop.f32.mrb[0].mxu0
    %v1359 = vpop.f32.mrb[0].mxu0
    %v1360 = vpop.f32.mrb[0].mxu0
    %1361 = vdwg.mxu0
    %v1362 = vadd.f32 %v1357, %v823
    %v1363 = vadd.f32 %v1362, %v1289
    %1365 = vrot.lane.b32.xlu0 %v944, 34
    %v1366 = vpop.permute.xlu0 %1365
    %1369 = vrot.lane.b32.xlu0 %v1059, 68
    %v1370 = vpop.permute.xlu0 %1369
    %1373 = vrot.lane.b32.xlu0 %v1174, 102
    %v1374 = vpop.permute.xlu0 %1373
    %1377 = vrot.lane.b32.xlu0 %v1289, 8
    %v1378 = vpop.permute.xlu0 %1377
    %1381 = vrot.lane.b32.xlu0 %v1363, 42
    %v1382 = vpop.permute.xlu0 %1381
    %v1384 = vsel %vm127, %v826, %v1366
    %vm1385 = vcmask 556032
    %v1386 = vsel %vm1385, %v1384, %v1370
    %vm1387 = vcmask 834560
    %v1388 = vsel %vm1387, %v1386, %v1374
    %vm1389 = vcmask 64512
    %v1390 = vsel %vm1389, %v1374, %v1378
    %vm1391 = vcmask 343040
    %v1392 = vsel %vm1391, %v1390, %v1382
    %v1395 = vcombine.low %v1388, %v1392
    %v1397 = vunpack.c.l.s4 1983009808
    %v1398 = vunpack.c.0.s8 %v1397
    %v1399 = vlaneseq
    %v1400 = vshrl.u32 %v1399, 7
    %v1401 = vsub.s32 %v1398, %v1400
    %v1402 = vrot.slane %v1395, %v1401
    %vm1404 = vcmask 1041408
    %vm1405 = vcmask 617474
    %vm1406 = vmor %vm1405, %vm1404
    %1407 = vst.msk [vmem:[#allocation11] sm:$0xf] %vm1406, %v1402
    // Predicated region
    $region54: #{tpu_custom_call.1} parent=1 // pred_check
      _
    $region55: #{tpu_custom_call.1} parent=1 // pred_check_branch
      %1409 = sbr.rel (0) target = $region57
    $region56: #{tpu_custom_call.1} parent=1 // pred_region
      %s1411 = ssub.s32 64, 64
      %1412 = vsyncadd [#allocation4], %s1411
      %s1414 = sshll.u32 [#allocation11], 4
      %s1415 = int_to_ptr.vmem [resolvable:$true] %s1414
      %1417 = dma.vmem_to_hbm [thread:$0]  %s1415, 64, %s8, [#allocation4]
    $region57: #{tpu_custom_call.1} parent=1 // pred_fallthru
      _
    // Predicated region
    $region58: #{tpu_custom_call.1} parent=1 // pred_check
      _
    $region59: #{tpu_custom_call.1} parent=1 // pred_check_branch
      %1419 = sbr.rel (0) target = $region61
    $region60: #{tpu_custom_call.1} parent=1 // pred_region
      %1420 = dma.done [#allocation4], 64
    $region61: #{tpu_custom_call.1} parent=1 // pred_fallthru
      _
    %1421 = vsyncpa [#allocation3], 1
    %1422 = vsyncpa [#allocation6], 1
    %1423 = vsyncpa [#allocation9], 1
    %1424 = vsyncpa [#allocation4], 1

</llo_original>
